<compile_context>
chip_gen: v5e
topology: v5e:2x2
jax: 0.10.0
libtpu: 0.0.40
codegen_flags: <defaults>
</compile_context>

<pallas_src>
import jax
import jax.numpy as jnp
import numpy as np
from jax.experimental import pallas as pl
from jax.experimental.pallas import tpu as pltpu

EMBED_SIZE = 300
HIDDEN_SIZE = 32
SEQ_LEN = 8
BATCH = 2


# ----------------------------- Pallas kernel --------------------------------
def word_att_kernel(x_ref, we_ref, be_ref, wih_ref, bgi_ref,
                    whh_f_ref, whh_b_ref, bhn_f_ref, bhn_b_ref,
                    h0_f_ref, h0_b_ref,
                    f_out_ref, h_out_ref, hidden_ref):
    B, H = h0_f_ref.shape
    SB = x_ref.shape[0]
    S = SB // B

    # ---- embedding: Linear(E, E) on all S*B rows at once (bf16 MXU, f32 acc) ----
    e = (jnp.dot(x_ref[...], we_ref[...], preferred_element_type=jnp.float32)
         + be_ref[...])                                            # (S*B, E_pad) f32

    # ---- hoisted input-side gate projections, both directions in one matmul ----
    # gi columns: [fwd r | fwd z | fwd n | bwd r | bwd z | bwd n], biases
    # (bih for all gates, plus bhh for r/z) already folded into bgi.
    gi = (jnp.dot(e.astype(jnp.bfloat16), wih_ref[...],
                  preferred_element_type=jnp.float32)
          + bgi_ref[...])                                          # (S*B, 6H) f32

    whh_f = whh_f_ref[...]        # (H, 3H) fused r|z|n hidden weights, fwd
    whh_b = whh_b_ref[...]        # (H, 3H) fused r|z|n hidden weights, bwd
    bhn_f = bhn_f_ref[...]        # (1, H)  b_hn fwd
    bhn_b = bhn_b_ref[...]        # (1, H)  b_hn bwd

    # PyTorch GRU cell (gate order r, z, n):
    #   r = sigmoid(W_ir x + b_ir + W_hr h + b_hr)
    #   z = sigmoid(W_iz x + b_iz + W_hz h + b_hz)
    #   n = tanh   (W_in x + b_in + r * (W_hn h + b_hn))
    #   h' = (1 - z) * n + z * h
    def gru_step(gi_gates, h, whh, bhn):
        gh = jnp.dot(h, whh, preferred_element_type=jnp.float32)   # (B, 3H), one dot
        r = jax.nn.sigmoid(gi_gates[:, 0:H] + gh[:, 0:H])
        z = jax.nn.sigmoid(gi_gates[:, H:2 * H] + gh[:, H:2 * H])
        n = jnp.tanh(gi_gates[:, 2 * H:3 * H] + r * (gh[:, 2 * H:3 * H] + bhn))
        return (1.0 - z) * n + z * h

    h_f = h0_f_ref[...]
    h_b = h0_b_ref[...]
    f_outs = [None] * S
    b_outs = [None] * S

    # Interleaved, statically unrolled recurrence: step t advances the forward
    # chain at time t and the (independent) backward chain at time S-1-t.
    for t in range(S):
        tb = S - 1 - t
        gi_f = gi[t * B:(t + 1) * B, 0:3 * H]
        gi_b = gi[tb * B:(tb + 1) * B, 3 * H:6 * H]
        h_f = gru_step(gi_f, h_f, whh_f, bhn_f)
        h_b = gru_step(gi_b, h_b, whh_b, bhn_b)
        f_outs[t] = h_f
        b_outs[tb] = h_b

    # ---- single stores at the end (no per-step masked partial stores) ----
    rows = [jnp.concatenate([f_outs[t], b_outs[t]], axis=-1) for t in range(S)]
    f_out_ref[...] = jnp.concatenate(rows, axis=0)                 # (S*B, 2H)
    h_out_ref[...] = jnp.concatenate([h_f, h_b], axis=0)           # (2B, H)
    hidden_ref[...] = jnp.concatenate([h_f, h_b], axis=-1)         # (B, 2H)


# ------------------------------ wrapper --------------------------------------
def word_att_net(x, h0, params):
    S, B, E = x.shape
    H = h0.shape[2]
    E_pad = ((E + 127) // 128) * 128                 # 300 -> 384, lane aligned

    # ---- layout plumbing (free in XLA, outside the kernel) ----
    x_flat = x.reshape(S * B, E).astype(jnp.bfloat16)
    x_pad = jnp.zeros((S * B, E_pad), jnp.bfloat16).at[:, :E].set(x_flat)

    we_pad = jnp.zeros((E_pad, E_pad), jnp.bfloat16).at[:E, :E].set(
        params["we"].astype(jnp.bfloat16))
    be_pad = jnp.zeros((1, E_pad), jnp.float32).at[:, :E].set(params["be"])

    def pack_wih(wih):                               # (3, E, H) -> (E, 3H)
        return jnp.concatenate([wih[0], wih[1], wih[2]], axis=1)

    wih_cat = jnp.concatenate(
        [pack_wih(params["wih_f"]), pack_wih(params["wih_b"])], axis=1)  # (E, 6H)
    wih_pad = jnp.zeros((E_pad, 6 * H), jnp.bfloat16).at[:E, :].set(
        wih_cat.astype(jnp.bfloat16))

    def pack_bgi(bih, bhh):                          # fold bih+bhh for r, z gates
        return jnp.concatenate([bih[0] + bhh[0], bih[1] + bhh[1], bih[2]], axis=1)

    bgi = jnp.concatenate([pack_bgi(params["bih_f"], params["bhh_f"]),
                           pack_bgi(params["bih_b"], params["bhh_b"])],
                          axis=1).astype(jnp.float32)              # (1, 6H)

    def pack_whh(whh):                               # (3, H, H) -> (H, 3H)
        return jnp.concatenate([whh[0], whh[1], whh[2]], axis=1)

    whh_f = pack_whh(params["whh_f"])
    whh_b = pack_whh(params["whh_b"])
    bhn_f = params["bhh_f"][2]                       # (1, H)
    bhn_b = params["bhh_b"][2]                       # (1, H)
    h0_f = h0[0]                                     # (B, H)
    h0_b = h0[1]                                     # (B, H)

    vmem = pl.BlockSpec(memory_space=pltpu.MemorySpace.VMEM)
    inputs = (x_pad, we_pad, be_pad, wih_pad, bgi,
              whh_f, whh_b, bhn_f, bhn_b, h0_f, h0_b)
    out_shapes = (
        jax.ShapeDtypeStruct((S * B, 2 * H), jnp.float32),   # f_output (flat)
        jax.ShapeDtypeStruct((2 * B, H), jnp.float32),       # h_output (flat)
        jax.ShapeDtypeStruct((B, 2 * H), jnp.float32),       # hidden (flat)
    )
    f_out, h_out, hidden = pl.pallas_call(
        word_att_kernel,
        out_shape=out_shapes,
        in_specs=[vmem] * len(inputs),
        out_specs=(vmem, vmem, vmem),
    )(*inputs)

    f_output = f_out.reshape(S, B, 2 * H)
    h_output = h_out.reshape(2, B, H)
    hidden = hidden.reshape(1, B, 2 * H)
    # Module returns (hidden.unsqueeze(0), h_output); f_output also returned for checking.
    return hidden, h_output, f_output


# ----------------------- deterministic parameter init ------------------------
def init_params(key, embed_size=EMBED_SIZE, hidden_size=HIDDEN_SIZE):
    kE, kbE, kf, kb = jax.random.split(key, 4)
    bound_e = 1.0 / float(np.sqrt(embed_size))
    bound_h = 1.0 / float(np.sqrt(hidden_size))
    we = jax.random.uniform(kE, (embed_size, embed_size), jnp.float32, -bound_e, bound_e)
    be = jax.random.uniform(kbE, (1, embed_size), jnp.float32, -bound_e, bound_e)

    def one_direction(k):
        k1, k2, k3, k4 = jax.random.split(k, 4)
        wih = jax.random.uniform(k1, (3, embed_size, hidden_size), jnp.float32, -bound_h, bound_h)
        whh = jax.random.uniform(k2, (3, hidden_size, hidden_size), jnp.float32, -bound_h, bound_h)
        bih = jax.random.uniform(k3, (3, 1, hidden_size), jnp.float32, -bound_h, bound_h)
        bhh = jax.random.uniform(k4, (3, 1, hidden_size), jnp.float32, -bound_h, bound_h)
        return wih, whh, bih, bhh

    wih_f, whh_f, bih_f, bhh_f = one_direction(kf)
    wih_b, whh_b, bih_b, bhh_b = one_direction(kb)
    return dict(we=we, be=be,
                wih_f=wih_f, whh_f=whh_f, bih_f=bih_f, bhh_f=bhh_f,
                wih_b=wih_b, whh_b=whh_b, bih_b=bih_b, bhh_b=bhh_b)


# --------------------------- pure-JAX reference -------------------------------
def reference_forward(x, h0, p):
    S, B, E = x.shape
    H = h0.shape[2]
    e = jnp.einsum("sbe,ef->sbf", x, p["we"]) + p["be"][0]

    def cell(et, h, wih, whh, bih, bhh):
        r = jax.nn.sigmoid(et @ wih[0] + bih[0] + h @ whh[0] + bhh[0])
        z = jax.nn.sigmoid(et @ wih[1] + bih[1] + h @ whh[1] + bhh[1])
        n = jnp.tanh(et @ wih[2] + bih[2] + r * (h @ whh[2] + bhh[2]))
        return (1.0 - z) * n + z * h

    h_f = h0[0]
    f_outs = []
    for t in range(S):
        h_f = cell(e[t], h_f, p["wih_f"], p["whh_f"], p["bih_f"], p["bhh_f"])
        f_outs.append(h_f)
    h_b = h0[1]
    b_outs = [None] * S
    for t in range(S - 1, -1, -1):
        h_b = cell(e[t], h_b, p["wih_b"], p["whh_b"], p["bih_b"], p["bhh_b"])
        b_outs[t] = h_b
    f_output = jnp.concatenate([jnp.stack(f_outs), jnp.stack(b_outs)], axis=-1)
    h_output = jnp.stack([h_f, h_b])
    hidden = jnp.concatenate([h_f, h_b], axis=-1)[None]
    return hidden, h_output, f_output


# ---------------------------------- main --------------------------------------
if __name__ == "__main__":
    key = jax.random.PRNGKey(0)
    k_x, k_h, k_p = jax.random.split(key, 3)

    x = jax.random.normal(k_x, (SEQ_LEN, BATCH, EMBED_SIZE), jnp.float32)
    h0 = jax.random.normal(k_h, (2, BATCH, HIDDEN_SIZE), jnp.float32)
    params = init_params(k_p)

    hidden, h_output, f_output = jax.jit(word_att_net)(x, h0, params)
    jax.block_until_ready((hidden, h_output, f_output))

    hidden_ref, h_output_ref, f_output_ref = reference_forward(x, h0, params)
    np.testing.assert_allclose(np.asarray(hidden), np.asarray(hidden_ref), rtol=2e-2, atol=2e-2)
    np.testing.assert_allclose(np.asarray(h_output), np.asarray(h_output_ref), rtol=2e-2, atol=2e-2)
    np.testing.assert_allclose(np.asarray(f_output), np.asarray(f_output_ref), rtol=2e-2, atol=2e-2)

    print("KERNEL_OK")
</pallas_src>

<mosaic_0001>
module attributes {stable_mosaic.version = 11 : i64} {
  func.func @word_att_kernel(%arg0: memref<16x384xbf16, #tpu.memory_space<vmem>>, %arg1: memref<384x384xbf16, #tpu.memory_space<vmem>>, %arg2: memref<1x384xf32, #tpu.memory_space<vmem>>, %arg3: memref<384x192xbf16, #tpu.memory_space<vmem>>, %arg4: memref<1x192xf32, #tpu.memory_space<vmem>>, %arg5: memref<32x96xf32, #tpu.memory_space<vmem>>, %arg6: memref<32x96xf32, #tpu.memory_space<vmem>>, %arg7: memref<1x32xf32, #tpu.memory_space<vmem>>, %arg8: memref<1x32xf32, #tpu.memory_space<vmem>>, %arg9: memref<2x32xf32, #tpu.memory_space<vmem>>, %arg10: memref<2x32xf32, #tpu.memory_space<vmem>>, %arg11: memref<16x64xf32, #tpu.memory_space<vmem>>, %arg12: memref<4x32xf32, #tpu.memory_space<vmem>>, %arg13: memref<2x64xf32, #tpu.memory_space<vmem>>) attributes {dimension_semantics = [], scalar_prefetch = 0 : i64, scratch_operands = 0 : i64, tpu.core_type = #tpu.core_type<tc>} {
    %c0 = arith.constant 0 : index
    %c0_0 = arith.constant 0 : index
    %0 = vector.load %arg0[%c0, %c0_0] : memref<16x384xbf16, #tpu.memory_space<vmem>>, vector<16x384xbf16>
    %c0_1 = arith.constant 0 : index
    %c0_2 = arith.constant 0 : index
    %1 = vector.load %arg1[%c0_1, %c0_2] : memref<384x384xbf16, #tpu.memory_space<vmem>>, vector<384x384xbf16>
    %cst = arith.constant dense<0.000000e+00> : vector<16x384xf32>
    %2 = tpu.matmul %0, %1, %cst {dimension_numbers = #tpu.dot_dimension_numbers<[1], [0], [0], [1], [0, 0, 1, 1], [], []>} : vector<16x384xbf16>, vector<384x384xbf16>, vector<16x384xf32> -> vector<16x384xf32>
    %c0_3 = arith.constant 0 : index
    %c0_4 = arith.constant 0 : index
    %3 = vector.load %arg2[%c0_3, %c0_4] : memref<1x384xf32, #tpu.memory_space<vmem>>, vector<1x384xf32>
    %4 = vector.broadcast %3 : vector<1x384xf32> to vector<16x384xf32>
    %5 = arith.addf %2, %4 : vector<16x384xf32>
    %6 = arith.truncf %5 : vector<16x384xf32> to vector<16x384xbf16>
    %c0_5 = arith.constant 0 : index
    %c0_6 = arith.constant 0 : index
    %7 = vector.load %arg3[%c0_5, %c0_6] : memref<384x192xbf16, #tpu.memory_space<vmem>>, vector<384x192xbf16>
    %cst_7 = arith.constant dense<0.000000e+00> : vector<16x192xf32>
    %8 = tpu.matmul %6, %7, %cst_7 {dimension_numbers = #tpu.dot_dimension_numbers<[1], [0], [0], [1], [0, 0, 1, 1], [], []>} : vector<16x384xbf16>, vector<384x192xbf16>, vector<16x192xf32> -> vector<16x192xf32>
    %c0_8 = arith.constant 0 : index
    %c0_9 = arith.constant 0 : index
    %9 = vector.load %arg4[%c0_8, %c0_9] : memref<1x192xf32, #tpu.memory_space<vmem>>, vector<1x192xf32>
    %10 = vector.broadcast %9 : vector<1x192xf32> to vector<16x192xf32>
    %11 = arith.addf %8, %10 : vector<16x192xf32>
    %c0_10 = arith.constant 0 : index
    %c0_11 = arith.constant 0 : index
    %12 = vector.load %arg5[%c0_10, %c0_11] : memref<32x96xf32, #tpu.memory_space<vmem>>, vector<32x96xf32>
    %c0_12 = arith.constant 0 : index
    %c0_13 = arith.constant 0 : index
    %13 = vector.load %arg6[%c0_12, %c0_13] : memref<32x96xf32, #tpu.memory_space<vmem>>, vector<32x96xf32>
    %c0_14 = arith.constant 0 : index
    %c0_15 = arith.constant 0 : index
    %14 = vector.load %arg7[%c0_14, %c0_15] : memref<1x32xf32, #tpu.memory_space<vmem>>, vector<1x32xf32>
    %c0_16 = arith.constant 0 : index
    %c0_17 = arith.constant 0 : index
    %15 = vector.load %arg8[%c0_16, %c0_17] : memref<1x32xf32, #tpu.memory_space<vmem>>, vector<1x32xf32>
    %c0_18 = arith.constant 0 : index
    %c0_19 = arith.constant 0 : index
    %16 = vector.load %arg9[%c0_18, %c0_19] : memref<2x32xf32, #tpu.memory_space<vmem>>, vector<2x32xf32>
    %c0_20 = arith.constant 0 : index
    %c0_21 = arith.constant 0 : index
    %17 = vector.load %arg10[%c0_20, %c0_21] : memref<2x32xf32, #tpu.memory_space<vmem>>, vector<2x32xf32>
    %18 = vector.extract_strided_slice %11 {offsets = [0, 0], sizes = [2, 96], strides = [1, 1]} : vector<16x192xf32> to vector<2x96xf32>
    %19 = vector.extract_strided_slice %11 {offsets = [14, 96], sizes = [2, 96], strides = [1, 1]} : vector<16x192xf32> to vector<2x96xf32>
    %cst_22 = arith.constant dense<0.000000e+00> : vector<2x96xf32>
    %20 = tpu.matmul %16, %12, %cst_22 {dimension_numbers = #tpu.dot_dimension_numbers<[1], [0], [0], [1], [0, 0, 1, 1], [], []>} : vector<2x32xf32>, vector<32x96xf32>, vector<2x96xf32> -> vector<2x96xf32>
    %21 = vector.extract_strided_slice %18 {offsets = [0, 0], sizes = [2, 32], strides = [1, 1]} : vector<2x96xf32> to vector<2x32xf32>
    %22 = vector.extract_strided_slice %20 {offsets = [0, 0], sizes = [2, 32], strides = [1, 1]} : vector<2x96xf32> to vector<2x32xf32>
    %23 = arith.addf %21, %22 : vector<2x32xf32>
    %24 = arith.negf %23 : vector<2x32xf32>
    %25 = math.exp %24 : vector<2x32xf32>
    %cst_23 = arith.constant 1.000000e+00 : f32
    %26 = vector.broadcast %cst_23 : f32 to vector<2x32xf32>
    %27 = arith.addf %26, %25 : vector<2x32xf32>
    %28 = arith.divf %26, %27 : vector<2x32xf32>
    %29 = vector.extract_strided_slice %18 {offsets = [0, 32], sizes = [2, 32], strides = [1, 1]} : vector<2x96xf32> to vector<2x32xf32>
    %30 = vector.extract_strided_slice %20 {offsets = [0, 32], sizes = [2, 32], strides = [1, 1]} : vector<2x96xf32> to vector<2x32xf32>
    %31 = arith.addf %29, %30 : vector<2x32xf32>
    %32 = arith.negf %31 : vector<2x32xf32>
    %33 = math.exp %32 : vector<2x32xf32>
    %cst_24 = arith.constant 1.000000e+00 : f32
    %34 = vector.broadcast %cst_24 : f32 to vector<2x32xf32>
    %35 = arith.addf %34, %33 : vector<2x32xf32>
    %36 = arith.divf %34, %35 : vector<2x32xf32>
    %37 = vector.extract_strided_slice %18 {offsets = [0, 64], sizes = [2, 32], strides = [1, 1]} : vector<2x96xf32> to vector<2x32xf32>
    %38 = vector.extract_strided_slice %20 {offsets = [0, 64], sizes = [2, 32], strides = [1, 1]} : vector<2x96xf32> to vector<2x32xf32>
    %39 = vector.broadcast %14 : vector<1x32xf32> to vector<2x32xf32>
    %40 = arith.addf %38, %39 : vector<2x32xf32>
    %41 = arith.mulf %28, %40 : vector<2x32xf32>
    %42 = arith.addf %37, %41 : vector<2x32xf32>
    %43 = math.tanh %42 : vector<2x32xf32>
    %cst_25 = arith.constant 1.000000e+00 : f32
    %44 = vector.broadcast %cst_25 : f32 to vector<2x32xf32>
    %45 = arith.subf %44, %36 : vector<2x32xf32>
    %46 = arith.mulf %45, %43 : vector<2x32xf32>
    %47 = arith.mulf %36, %16 : vector<2x32xf32>
    %48 = arith.addf %46, %47 : vector<2x32xf32>
    %cst_26 = arith.constant dense<0.000000e+00> : vector<2x96xf32>
    %49 = tpu.matmul %17, %13, %cst_26 {dimension_numbers = #tpu.dot_dimension_numbers<[1], [0], [0], [1], [0, 0, 1, 1], [], []>} : vector<2x32xf32>, vector<32x96xf32>, vector<2x96xf32> -> vector<2x96xf32>
    %50 = vector.extract_strided_slice %19 {offsets = [0, 0], sizes = [2, 32], strides = [1, 1]} : vector<2x96xf32> to vector<2x32xf32>
    %51 = vector.extract_strided_slice %49 {offsets = [0, 0], sizes = [2, 32], strides = [1, 1]} : vector<2x96xf32> to vector<2x32xf32>
    %52 = arith.addf %50, %51 : vector<2x32xf32>
    %53 = arith.negf %52 : vector<2x32xf32>
    %54 = math.exp %53 : vector<2x32xf32>
    %cst_27 = arith.constant 1.000000e+00 : f32
    %55 = vector.broadcast %cst_27 : f32 to vector<2x32xf32>
    %56 = arith.addf %55, %54 : vector<2x32xf32>
    %57 = arith.divf %55, %56 : vector<2x32xf32>
    %58 = vector.extract_strided_slice %19 {offsets = [0, 32], sizes = [2, 32], strides = [1, 1]} : vector<2x96xf32> to vector<2x32xf32>
    %59 = vector.extract_strided_slice %49 {offsets = [0, 32], sizes = [2, 32], strides = [1, 1]} : vector<2x96xf32> to vector<2x32xf32>
    %60 = arith.addf %58, %59 : vector<2x32xf32>
    %61 = arith.negf %60 : vector<2x32xf32>
    %62 = math.exp %61 : vector<2x32xf32>
    %cst_28 = arith.constant 1.000000e+00 : f32
    %63 = vector.broadcast %cst_28 : f32 to vector<2x32xf32>
    %64 = arith.addf %63, %62 : vector<2x32xf32>
    %65 = arith.divf %63, %64 : vector<2x32xf32>
    %66 = vector.extract_strided_slice %19 {offsets = [0, 64], sizes = [2, 32], strides = [1, 1]} : vector<2x96xf32> to vector<2x32xf32>
    %67 = vector.extract_strided_slice %49 {offsets = [0, 64], sizes = [2, 32], strides = [1, 1]} : vector<2x96xf32> to vector<2x32xf32>
    %68 = vector.broadcast %15 : vector<1x32xf32> to vector<2x32xf32>
    %69 = arith.addf %67, %68 : vector<2x32xf32>
    %70 = arith.mulf %57, %69 : vector<2x32xf32>
    %71 = arith.addf %66, %70 : vector<2x32xf32>
    %72 = math.tanh %71 : vector<2x32xf32>
    %cst_29 = arith.constant 1.000000e+00 : f32
    %73 = vector.broadcast %cst_29 : f32 to vector<2x32xf32>
    %74 = arith.subf %73, %65 : vector<2x32xf32>
    %75 = arith.mulf %74, %72 : vector<2x32xf32>
    %76 = arith.mulf %65, %17 : vector<2x32xf32>
    %77 = arith.addf %75, %76 : vector<2x32xf32>
    %78 = vector.extract_strided_slice %11 {offsets = [2, 0], sizes = [2, 96], strides = [1, 1]} : vector<16x192xf32> to vector<2x96xf32>
    %79 = vector.extract_strided_slice %11 {offsets = [12, 96], sizes = [2, 96], strides = [1, 1]} : vector<16x192xf32> to vector<2x96xf32>
    %cst_30 = arith.constant dense<0.000000e+00> : vector<2x96xf32>
    %80 = tpu.matmul %48, %12, %cst_30 {dimension_numbers = #tpu.dot_dimension_numbers<[1], [0], [0], [1], [0, 0, 1, 1], [], []>} : vector<2x32xf32>, vector<32x96xf32>, vector<2x96xf32> -> vector<2x96xf32>
    %81 = vector.extract_strided_slice %78 {offsets = [0, 0], sizes = [2, 32], strides = [1, 1]} : vector<2x96xf32> to vector<2x32xf32>
    %82 = vector.extract_strided_slice %80 {offsets = [0, 0], sizes = [2, 32], strides = [1, 1]} : vector<2x96xf32> to vector<2x32xf32>
    %83 = arith.addf %81, %82 : vector<2x32xf32>
    %84 = arith.negf %83 : vector<2x32xf32>
    %85 = math.exp %84 : vector<2x32xf32>
    %cst_31 = arith.constant 1.000000e+00 : f32
    %86 = vector.broadcast %cst_31 : f32 to vector<2x32xf32>
    %87 = arith.addf %86, %85 : vector<2x32xf32>
    %88 = arith.divf %86, %87 : vector<2x32xf32>
    %89 = vector.extract_strided_slice %78 {offsets = [0, 32], sizes = [2, 32], strides = [1, 1]} : vector<2x96xf32> to vector<2x32xf32>
    %90 = vector.extract_strided_slice %80 {offsets = [0, 32], sizes = [2, 32], strides = [1, 1]} : vector<2x96xf32> to vector<2x32xf32>
    %91 = arith.addf %89, %90 : vector<2x32xf32>
    %92 = arith.negf %91 : vector<2x32xf32>
    %93 = math.exp %92 : vector<2x32xf32>
    %cst_32 = arith.constant 1.000000e+00 : f32
    %94 = vector.broadcast %cst_32 : f32 to vector<2x32xf32>
    %95 = arith.addf %94, %93 : vector<2x32xf32>
    %96 = arith.divf %94, %95 : vector<2x32xf32>
    %97 = vector.extract_strided_slice %78 {offsets = [0, 64], sizes = [2, 32], strides = [1, 1]} : vector<2x96xf32> to vector<2x32xf32>
    %98 = vector.extract_strided_slice %80 {offsets = [0, 64], sizes = [2, 32], strides = [1, 1]} : vector<2x96xf32> to vector<2x32xf32>
    %99 = vector.broadcast %14 : vector<1x32xf32> to vector<2x32xf32>
    %100 = arith.addf %98, %99 : vector<2x32xf32>
    %101 = arith.mulf %88, %100 : vector<2x32xf32>
    %102 = arith.addf %97, %101 : vector<2x32xf32>
    %103 = math.tanh %102 : vector<2x32xf32>
    %cst_33 = arith.constant 1.000000e+00 : f32
    %104 = vector.broadcast %cst_33 : f32 to vector<2x32xf32>
    %105 = arith.subf %104, %96 : vector<2x32xf32>
    %106 = arith.mulf %105, %103 : vector<2x32xf32>
    %107 = arith.mulf %96, %48 : vector<2x32xf32>
    %108 = arith.addf %106, %107 : vector<2x32xf32>
    %cst_34 = arith.constant dense<0.000000e+00> : vector<2x96xf32>
    %109 = tpu.matmul %77, %13, %cst_34 {dimension_numbers = #tpu.dot_dimension_numbers<[1], [0], [0], [1], [0, 0, 1, 1], [], []>} : vector<2x32xf32>, vector<32x96xf32>, vector<2x96xf32> -> vector<2x96xf32>
    %110 = vector.extract_strided_slice %79 {offsets = [0, 0], sizes = [2, 32], strides = [1, 1]} : vector<2x96xf32> to vector<2x32xf32>
    %111 = vector.extract_strided_slice %109 {offsets = [0, 0], sizes = [2, 32], strides = [1, 1]} : vector<2x96xf32> to vector<2x32xf32>
    %112 = arith.addf %110, %111 : vector<2x32xf32>
    %113 = arith.negf %112 : vector<2x32xf32>
    %114 = math.exp %113 : vector<2x32xf32>
    %cst_35 = arith.constant 1.000000e+00 : f32
    %115 = vector.broadcast %cst_35 : f32 to vector<2x32xf32>
    %116 = arith.addf %115, %114 : vector<2x32xf32>
    %117 = arith.divf %115, %116 : vector<2x32xf32>
    %118 = vector.extract_strided_slice %79 {offsets = [0, 32], sizes = [2, 32], strides = [1, 1]} : vector<2x96xf32> to vector<2x32xf32>
    %119 = vector.extract_strided_slice %109 {offsets = [0, 32], sizes = [2, 32], strides = [1, 1]} : vector<2x96xf32> to vector<2x32xf32>
    %120 = arith.addf %118, %119 : vector<2x32xf32>
    %121 = arith.negf %120 : vector<2x32xf32>
    %122 = math.exp %121 : vector<2x32xf32>
    %cst_36 = arith.constant 1.000000e+00 : f32
    %123 = vector.broadcast %cst_36 : f32 to vector<2x32xf32>
    %124 = arith.addf %123, %122 : vector<2x32xf32>
    %125 = arith.divf %123, %124 : vector<2x32xf32>
    %126 = vector.extract_strided_slice %79 {offsets = [0, 64], sizes = [2, 32], strides = [1, 1]} : vector<2x96xf32> to vector<2x32xf32>
    %127 = vector.extract_strided_slice %109 {offsets = [0, 64], sizes = [2, 32], strides = [1, 1]} : vector<2x96xf32> to vector<2x32xf32>
    %128 = vector.broadcast %15 : vector<1x32xf32> to vector<2x32xf32>
    %129 = arith.addf %127, %128 : vector<2x32xf32>
    %130 = arith.mulf %117, %129 : vector<2x32xf32>
    %131 = arith.addf %126, %130 : vector<2x32xf32>
    %132 = math.tanh %131 : vector<2x32xf32>
    %cst_37 = arith.constant 1.000000e+00 : f32
    %133 = vector.broadcast %cst_37 : f32 to vector<2x32xf32>
    %134 = arith.subf %133, %125 : vector<2x32xf32>
    %135 = arith.mulf %134, %132 : vector<2x32xf32>
    %136 = arith.mulf %125, %77 : vector<2x32xf32>
    %137 = arith.addf %135, %136 : vector<2x32xf32>
    %138 = vector.extract_strided_slice %11 {offsets = [4, 0], sizes = [2, 96], strides = [1, 1]} : vector<16x192xf32> to vector<2x96xf32>
    %139 = vector.extract_strided_slice %11 {offsets = [10, 96], sizes = [2, 96], strides = [1, 1]} : vector<16x192xf32> to vector<2x96xf32>
    %cst_38 = arith.constant dense<0.000000e+00> : vector<2x96xf32>
    %140 = tpu.matmul %108, %12, %cst_38 {dimension_numbers = #tpu.dot_dimension_numbers<[1], [0], [0], [1], [0, 0, 1, 1], [], []>} : vector<2x32xf32>, vector<32x96xf32>, vector<2x96xf32> -> vector<2x96xf32>
    %141 = vector.extract_strided_slice %138 {offsets = [0, 0], sizes = [2, 32], strides = [1, 1]} : vector<2x96xf32> to vector<2x32xf32>
    %142 = vector.extract_strided_slice %140 {offsets = [0, 0], sizes = [2, 32], strides = [1, 1]} : vector<2x96xf32> to vector<2x32xf32>
    %143 = arith.addf %141, %142 : vector<2x32xf32>
    %144 = arith.negf %143 : vector<2x32xf32>
    %145 = math.exp %144 : vector<2x32xf32>
    %cst_39 = arith.constant 1.000000e+00 : f32
    %146 = vector.broadcast %cst_39 : f32 to vector<2x32xf32>
    %147 = arith.addf %146, %145 : vector<2x32xf32>
    %148 = arith.divf %146, %147 : vector<2x32xf32>
    %149 = vector.extract_strided_slice %138 {offsets = [0, 32], sizes = [2, 32], strides = [1, 1]} : vector<2x96xf32> to vector<2x32xf32>
    %150 = vector.extract_strided_slice %140 {offsets = [0, 32], sizes = [2, 32], strides = [1, 1]} : vector<2x96xf32> to vector<2x32xf32>
    %151 = arith.addf %149, %150 : vector<2x32xf32>
    %152 = arith.negf %151 : vector<2x32xf32>
    %153 = math.exp %152 : vector<2x32xf32>
    %cst_40 = arith.constant 1.000000e+00 : f32
    %154 = vector.broadcast %cst_40 : f32 to vector<2x32xf32>
    %155 = arith.addf %154, %153 : vector<2x32xf32>
    %156 = arith.divf %154, %155 : vector<2x32xf32>
    %157 = vector.extract_strided_slice %138 {offsets = [0, 64], sizes = [2, 32], strides = [1, 1]} : vector<2x96xf32> to vector<2x32xf32>
    %158 = vector.extract_strided_slice %140 {offsets = [0, 64], sizes = [2, 32], strides = [1, 1]} : vector<2x96xf32> to vector<2x32xf32>
    %159 = vector.broadcast %14 : vector<1x32xf32> to vector<2x32xf32>
    %160 = arith.addf %158, %159 : vector<2x32xf32>
    %161 = arith.mulf %148, %160 : vector<2x32xf32>
    %162 = arith.addf %157, %161 : vector<2x32xf32>
    %163 = math.tanh %162 : vector<2x32xf32>
    %cst_41 = arith.constant 1.000000e+00 : f32
    %164 = vector.broadcast %cst_41 : f32 to vector<2x32xf32>
    %165 = arith.subf %164, %156 : vector<2x32xf32>
    %166 = arith.mulf %165, %163 : vector<2x32xf32>
    %167 = arith.mulf %156, %108 : vector<2x32xf32>
    %168 = arith.addf %166, %167 : vector<2x32xf32>
    %cst_42 = arith.constant dense<0.000000e+00> : vector<2x96xf32>
    %169 = tpu.matmul %137, %13, %cst_42 {dimension_numbers = #tpu.dot_dimension_numbers<[1], [0], [0], [1], [0, 0, 1, 1], [], []>} : vector<2x32xf32>, vector<32x96xf32>, vector<2x96xf32> -> vector<2x96xf32>
    %170 = vector.extract_strided_slice %139 {offsets = [0, 0], sizes = [2, 32], strides = [1, 1]} : vector<2x96xf32> to vector<2x32xf32>
    %171 = vector.extract_strided_slice %169 {offsets = [0, 0], sizes = [2, 32], strides = [1, 1]} : vector<2x96xf32> to vector<2x32xf32>
    %172 = arith.addf %170, %171 : vector<2x32xf32>
    %173 = arith.negf %172 : vector<2x32xf32>
    %174 = math.exp %173 : vector<2x32xf32>
    %cst_43 = arith.constant 1.000000e+00 : f32
    %175 = vector.broadcast %cst_43 : f32 to vector<2x32xf32>
    %176 = arith.addf %175, %174 : vector<2x32xf32>
    %177 = arith.divf %175, %176 : vector<2x32xf32>
    %178 = vector.extract_strided_slice %139 {offsets = [0, 32], sizes = [2, 32], strides = [1, 1]} : vector<2x96xf32> to vector<2x32xf32>
    %179 = vector.extract_strided_slice %169 {offsets = [0, 32], sizes = [2, 32], strides = [1, 1]} : vector<2x96xf32> to vector<2x32xf32>
    %180 = arith.addf %178, %179 : vector<2x32xf32>
    %181 = arith.negf %180 : vector<2x32xf32>
    %182 = math.exp %181 : vector<2x32xf32>
    %cst_44 = arith.constant 1.000000e+00 : f32
    %183 = vector.broadcast %cst_44 : f32 to vector<2x32xf32>
    %184 = arith.addf %183, %182 : vector<2x32xf32>
    %185 = arith.divf %183, %184 : vector<2x32xf32>
    %186 = vector.extract_strided_slice %139 {offsets = [0, 64], sizes = [2, 32], strides = [1, 1]} : vector<2x96xf32> to vector<2x32xf32>
    %187 = vector.extract_strided_slice %169 {offsets = [0, 64], sizes = [2, 32], strides = [1, 1]} : vector<2x96xf32> to vector<2x32xf32>
    %188 = vector.broadcast %15 : vector<1x32xf32> to vector<2x32xf32>
    %189 = arith.addf %187, %188 : vector<2x32xf32>
    %190 = arith.mulf %177, %189 : vector<2x32xf32>
    %191 = arith.addf %186, %190 : vector<2x32xf32>
    %192 = math.tanh %191 : vector<2x32xf32>
    %cst_45 = arith.constant 1.000000e+00 : f32
    %193 = vector.broadcast %cst_45 : f32 to vector<2x32xf32>
    %194 = arith.subf %193, %185 : vector<2x32xf32>
    %195 = arith.mulf %194, %192 : vector<2x32xf32>
    %196 = arith.mulf %185, %137 : vector<2x32xf32>
    %197 = arith.addf %195, %196 : vector<2x32xf32>
    %198 = vector.extract_strided_slice %11 {offsets = [6, 0], sizes = [2, 96], strides = [1, 1]} : vector<16x192xf32> to vector<2x96xf32>
    %199 = vector.extract_strided_slice %11 {offsets = [8, 96], sizes = [2, 96], strides = [1, 1]} : vector<16x192xf32> to vector<2x96xf32>
    %cst_46 = arith.constant dense<0.000000e+00> : vector<2x96xf32>
    %200 = tpu.matmul %168, %12, %cst_46 {dimension_numbers = #tpu.dot_dimension_numbers<[1], [0], [0], [1], [0, 0, 1, 1], [], []>} : vector<2x32xf32>, vector<32x96xf32>, vector<2x96xf32> -> vector<2x96xf32>
    %201 = vector.extract_strided_slice %198 {offsets = [0, 0], sizes = [2, 32], strides = [1, 1]} : vector<2x96xf32> to vector<2x32xf32>
    %202 = vector.extract_strided_slice %200 {offsets = [0, 0], sizes = [2, 32], strides = [1, 1]} : vector<2x96xf32> to vector<2x32xf32>
    %203 = arith.addf %201, %202 : vector<2x32xf32>
    %204 = arith.negf %203 : vector<2x32xf32>
    %205 = math.exp %204 : vector<2x32xf32>
    %cst_47 = arith.constant 1.000000e+00 : f32
    %206 = vector.broadcast %cst_47 : f32 to vector<2x32xf32>
    %207 = arith.addf %206, %205 : vector<2x32xf32>
    %208 = arith.divf %206, %207 : vector<2x32xf32>
    %209 = vector.extract_strided_slice %198 {offsets = [0, 32], sizes = [2, 32], strides = [1, 1]} : vector<2x96xf32> to vector<2x32xf32>
    %210 = vector.extract_strided_slice %200 {offsets = [0, 32], sizes = [2, 32], strides = [1, 1]} : vector<2x96xf32> to vector<2x32xf32>
    %211 = arith.addf %209, %210 : vector<2x32xf32>
    %212 = arith.negf %211 : vector<2x32xf32>
    %213 = math.exp %212 : vector<2x32xf32>
    %cst_48 = arith.constant 1.000000e+00 : f32
    %214 = vector.broadcast %cst_48 : f32 to vector<2x32xf32>
    %215 = arith.addf %214, %213 : vector<2x32xf32>
    %216 = arith.divf %214, %215 : vector<2x32xf32>
    %217 = vector.extract_strided_slice %198 {offsets = [0, 64], sizes = [2, 32], strides = [1, 1]} : vector<2x96xf32> to vector<2x32xf32>
    %218 = vector.extract_strided_slice %200 {offsets = [0, 64], sizes = [2, 32], strides = [1, 1]} : vector<2x96xf32> to vector<2x32xf32>
    %219 = vector.broadcast %14 : vector<1x32xf32> to vector<2x32xf32>
    %220 = arith.addf %218, %219 : vector<2x32xf32>
    %221 = arith.mulf %208, %220 : vector<2x32xf32>
    %222 = arith.addf %217, %221 : vector<2x32xf32>
    %223 = math.tanh %222 : vector<2x32xf32>
    %cst_49 = arith.constant 1.000000e+00 : f32
    %224 = vector.broadcast %cst_49 : f32 to vector<2x32xf32>
    %225 = arith.subf %224, %216 : vector<2x32xf32>
    %226 = arith.mulf %225, %223 : vector<2x32xf32>
    %227 = arith.mulf %216, %168 : vector<2x32xf32>
    %228 = arith.addf %226, %227 : vector<2x32xf32>
    %cst_50 = arith.constant dense<0.000000e+00> : vector<2x96xf32>
    %229 = tpu.matmul %197, %13, %cst_50 {dimension_numbers = #tpu.dot_dimension_numbers<[1], [0], [0], [1], [0, 0, 1, 1], [], []>} : vector<2x32xf32>, vector<32x96xf32>, vector<2x96xf32> -> vector<2x96xf32>
    %230 = vector.extract_strided_slice %199 {offsets = [0, 0], sizes = [2, 32], strides = [1, 1]} : vector<2x96xf32> to vector<2x32xf32>
    %231 = vector.extract_strided_slice %229 {offsets = [0, 0], sizes = [2, 32], strides = [1, 1]} : vector<2x96xf32> to vector<2x32xf32>
    %232 = arith.addf %230, %231 : vector<2x32xf32>
    %233 = arith.negf %232 : vector<2x32xf32>
    %234 = math.exp %233 : vector<2x32xf32>
    %cst_51 = arith.constant 1.000000e+00 : f32
    %235 = vector.broadcast %cst_51 : f32 to vector<2x32xf32>
    %236 = arith.addf %235, %234 : vector<2x32xf32>
    %237 = arith.divf %235, %236 : vector<2x32xf32>
    %238 = vector.extract_strided_slice %199 {offsets = [0, 32], sizes = [2, 32], strides = [1, 1]} : vector<2x96xf32> to vector<2x32xf32>
    %239 = vector.extract_strided_slice %229 {offsets = [0, 32], sizes = [2, 32], strides = [1, 1]} : vector<2x96xf32> to vector<2x32xf32>
    %240 = arith.addf %238, %239 : vector<2x32xf32>
    %241 = arith.negf %240 : vector<2x32xf32>
    %242 = math.exp %241 : vector<2x32xf32>
    %cst_52 = arith.constant 1.000000e+00 : f32
    %243 = vector.broadcast %cst_52 : f32 to vector<2x32xf32>
    %244 = arith.addf %243, %242 : vector<2x32xf32>
    %245 = arith.divf %243, %244 : vector<2x32xf32>
    %246 = vector.extract_strided_slice %199 {offsets = [0, 64], sizes = [2, 32], strides = [1, 1]} : vector<2x96xf32> to vector<2x32xf32>
    %247 = vector.extract_strided_slice %229 {offsets = [0, 64], sizes = [2, 32], strides = [1, 1]} : vector<2x96xf32> to vector<2x32xf32>
    %248 = vector.broadcast %15 : vector<1x32xf32> to vector<2x32xf32>
    %249 = arith.addf %247, %248 : vector<2x32xf32>
    %250 = arith.mulf %237, %249 : vector<2x32xf32>
    %251 = arith.addf %246, %250 : vector<2x32xf32>
    %252 = math.tanh %251 : vector<2x32xf32>
    %cst_53 = arith.constant 1.000000e+00 : f32
    %253 = vector.broadcast %cst_53 : f32 to vector<2x32xf32>
    %254 = arith.subf %253, %245 : vector<2x32xf32>
    %255 = arith.mulf %254, %252 : vector<2x32xf32>
    %256 = arith.mulf %245, %197 : vector<2x32xf32>
    %257 = arith.addf %255, %256 : vector<2x32xf32>
    %258 = vector.extract_strided_slice %11 {offsets = [8, 0], sizes = [2, 96], strides = [1, 1]} : vector<16x192xf32> to vector<2x96xf32>
    %259 = vector.extract_strided_slice %11 {offsets = [6, 96], sizes = [2, 96], strides = [1, 1]} : vector<16x192xf32> to vector<2x96xf32>
    %cst_54 = arith.constant dense<0.000000e+00> : vector<2x96xf32>
    %260 = tpu.matmul %228, %12, %cst_54 {dimension_numbers = #tpu.dot_dimension_numbers<[1], [0], [0], [1], [0, 0, 1, 1], [], []>} : vector<2x32xf32>, vector<32x96xf32>, vector<2x96xf32> -> vector<2x96xf32>
    %261 = vector.extract_strided_slice %258 {offsets = [0, 0], sizes = [2, 32], strides = [1, 1]} : vector<2x96xf32> to vector<2x32xf32>
    %262 = vector.extract_strided_slice %260 {offsets = [0, 0], sizes = [2, 32], strides = [1, 1]} : vector<2x96xf32> to vector<2x32xf32>
    %263 = arith.addf %261, %262 : vector<2x32xf32>
    %264 = arith.negf %263 : vector<2x32xf32>
    %265 = math.exp %264 : vector<2x32xf32>
    %cst_55 = arith.constant 1.000000e+00 : f32
    %266 = vector.broadcast %cst_55 : f32 to vector<2x32xf32>
    %267 = arith.addf %266, %265 : vector<2x32xf32>
    %268 = arith.divf %266, %267 : vector<2x32xf32>
    %269 = vector.extract_strided_slice %258 {offsets = [0, 32], sizes = [2, 32], strides = [1, 1]} : vector<2x96xf32> to vector<2x32xf32>
    %270 = vector.extract_strided_slice %260 {offsets = [0, 32], sizes = [2, 32], strides = [1, 1]} : vector<2x96xf32> to vector<2x32xf32>
    %271 = arith.addf %269, %270 : vector<2x32xf32>
    %272 = arith.negf %271 : vector<2x32xf32>
    %273 = math.exp %272 : vector<2x32xf32>
    %cst_56 = arith.constant 1.000000e+00 : f32
    %274 = vector.broadcast %cst_56 : f32 to vector<2x32xf32>
    %275 = arith.addf %274, %273 : vector<2x32xf32>
    %276 = arith.divf %274, %275 : vector<2x32xf32>
    %277 = vector.extract_strided_slice %258 {offsets = [0, 64], sizes = [2, 32], strides = [1, 1]} : vector<2x96xf32> to vector<2x32xf32>
    %278 = vector.extract_strided_slice %260 {offsets = [0, 64], sizes = [2, 32], strides = [1, 1]} : vector<2x96xf32> to vector<2x32xf32>
    %279 = vector.broadcast %14 : vector<1x32xf32> to vector<2x32xf32>
    %280 = arith.addf %278, %279 : vector<2x32xf32>
    %281 = arith.mulf %268, %280 : vector<2x32xf32>
    %282 = arith.addf %277, %281 : vector<2x32xf32>
    %283 = math.tanh %282 : vector<2x32xf32>
    %cst_57 = arith.constant 1.000000e+00 : f32
    %284 = vector.broadcast %cst_57 : f32 to vector<2x32xf32>
    %285 = arith.subf %284, %276 : vector<2x32xf32>
    %286 = arith.mulf %285, %283 : vector<2x32xf32>
    %287 = arith.mulf %276, %228 : vector<2x32xf32>
    %288 = arith.addf %286, %287 : vector<2x32xf32>
    %cst_58 = arith.constant dense<0.000000e+00> : vector<2x96xf32>
    %289 = tpu.matmul %257, %13, %cst_58 {dimension_numbers = #tpu.dot_dimension_numbers<[1], [0], [0], [1], [0, 0, 1, 1], [], []>} : vector<2x32xf32>, vector<32x96xf32>, vector<2x96xf32> -> vector<2x96xf32>
    %290 = vector.extract_strided_slice %259 {offsets = [0, 0], sizes = [2, 32], strides = [1, 1]} : vector<2x96xf32> to vector<2x32xf32>
    %291 = vector.extract_strided_slice %289 {offsets = [0, 0], sizes = [2, 32], strides = [1, 1]} : vector<2x96xf32> to vector<2x32xf32>
    %292 = arith.addf %290, %291 : vector<2x32xf32>
    %293 = arith.negf %292 : vector<2x32xf32>
    %294 = math.exp %293 : vector<2x32xf32>
    %cst_59 = arith.constant 1.000000e+00 : f32
    %295 = vector.broadcast %cst_59 : f32 to vector<2x32xf32>
    %296 = arith.addf %295, %294 : vector<2x32xf32>
    %297 = arith.divf %295, %296 : vector<2x32xf32>
    %298 = vector.extract_strided_slice %259 {offsets = [0, 32], sizes = [2, 32], strides = [1, 1]} : vector<2x96xf32> to vector<2x32xf32>
    %299 = vector.extract_strided_slice %289 {offsets = [0, 32], sizes = [2, 32], strides = [1, 1]} : vector<2x96xf32> to vector<2x32xf32>
    %300 = arith.addf %298, %299 : vector<2x32xf32>
    %301 = arith.negf %300 : vector<2x32xf32>
    %302 = math.exp %301 : vector<2x32xf32>
    %cst_60 = arith.constant 1.000000e+00 : f32
    %303 = vector.broadcast %cst_60 : f32 to vector<2x32xf32>
    %304 = arith.addf %303, %302 : vector<2x32xf32>
    %305 = arith.divf %303, %304 : vector<2x32xf32>
    %306 = vector.extract_strided_slice %259 {offsets = [0, 64], sizes = [2, 32], strides = [1, 1]} : vector<2x96xf32> to vector<2x32xf32>
    %307 = vector.extract_strided_slice %289 {offsets = [0, 64], sizes = [2, 32], strides = [1, 1]} : vector<2x96xf32> to vector<2x32xf32>
    %308 = vector.broadcast %15 : vector<1x32xf32> to vector<2x32xf32>
    %309 = arith.addf %307, %308 : vector<2x32xf32>
    %310 = arith.mulf %297, %309 : vector<2x32xf32>
    %311 = arith.addf %306, %310 : vector<2x32xf32>
    %312 = math.tanh %311 : vector<2x32xf32>
    %cst_61 = arith.constant 1.000000e+00 : f32
    %313 = vector.broadcast %cst_61 : f32 to vector<2x32xf32>
    %314 = arith.subf %313, %305 : vector<2x32xf32>
    %315 = arith.mulf %314, %312 : vector<2x32xf32>
    %316 = arith.mulf %305, %257 : vector<2x32xf32>
    %317 = arith.addf %315, %316 : vector<2x32xf32>
    %318 = vector.extract_strided_slice %11 {offsets = [10, 0], sizes = [2, 96], strides = [1, 1]} : vector<16x192xf32> to vector<2x96xf32>
    %319 = vector.extract_strided_slice %11 {offsets = [4, 96], sizes = [2, 96], strides = [1, 1]} : vector<16x192xf32> to vector<2x96xf32>
    %cst_62 = arith.constant dense<0.000000e+00> : vector<2x96xf32>
    %320 = tpu.matmul %288, %12, %cst_62 {dimension_numbers = #tpu.dot_dimension_numbers<[1], [0], [0], [1], [0, 0, 1, 1], [], []>} : vector<2x32xf32>, vector<32x96xf32>, vector<2x96xf32> -> vector<2x96xf32>
    %321 = vector.extract_strided_slice %318 {offsets = [0, 0], sizes = [2, 32], strides = [1, 1]} : vector<2x96xf32> to vector<2x32xf32>
    %322 = vector.extract_strided_slice %320 {offsets = [0, 0], sizes = [2, 32], strides = [1, 1]} : vector<2x96xf32> to vector<2x32xf32>
    %323 = arith.addf %321, %322 : vector<2x32xf32>
    %324 = arith.negf %323 : vector<2x32xf32>
    %325 = math.exp %324 : vector<2x32xf32>
    %cst_63 = arith.constant 1.000000e+00 : f32
    %326 = vector.broadcast %cst_63 : f32 to vector<2x32xf32>
    %327 = arith.addf %326, %325 : vector<2x32xf32>
    %328 = arith.divf %326, %327 : vector<2x32xf32>
    %329 = vector.extract_strided_slice %318 {offsets = [0, 32], sizes = [2, 32], strides = [1, 1]} : vector<2x96xf32> to vector<2x32xf32>
    %330 = vector.extract_strided_slice %320 {offsets = [0, 32], sizes = [2, 32], strides = [1, 1]} : vector<2x96xf32> to vector<2x32xf32>
    %331 = arith.addf %329, %330 : vector<2x32xf32>
    %332 = arith.negf %331 : vector<2x32xf32>
    %333 = math.exp %332 : vector<2x32xf32>
    %cst_64 = arith.constant 1.000000e+00 : f32
    %334 = vector.broadcast %cst_64 : f32 to vector<2x32xf32>
    %335 = arith.addf %334, %333 : vector<2x32xf32>
    %336 = arith.divf %334, %335 : vector<2x32xf32>
    %337 = vector.extract_strided_slice %318 {offsets = [0, 64], sizes = [2, 32], strides = [1, 1]} : vector<2x96xf32> to vector<2x32xf32>
    %338 = vector.extract_strided_slice %320 {offsets = [0, 64], sizes = [2, 32], strides = [1, 1]} : vector<2x96xf32> to vector<2x32xf32>
    %339 = vector.broadcast %14 : vector<1x32xf32> to vector<2x32xf32>
    %340 = arith.addf %338, %339 : vector<2x32xf32>
    %341 = arith.mulf %328, %340 : vector<2x32xf32>
    %342 = arith.addf %337, %341 : vector<2x32xf32>
    %343 = math.tanh %342 : vector<2x32xf32>
    %cst_65 = arith.constant 1.000000e+00 : f32
    %344 = vector.broadcast %cst_65 : f32 to vector<2x32xf32>
    %345 = arith.subf %344, %336 : vector<2x32xf32>
    %346 = arith.mulf %345, %343 : vector<2x32xf32>
    %347 = arith.mulf %336, %288 : vector<2x32xf32>
    %348 = arith.addf %346, %347 : vector<2x32xf32>
    %cst_66 = arith.constant dense<0.000000e+00> : vector<2x96xf32>
    %349 = tpu.matmul %317, %13, %cst_66 {dimension_numbers = #tpu.dot_dimension_numbers<[1], [0], [0], [1], [0, 0, 1, 1], [], []>} : vector<2x32xf32>, vector<32x96xf32>, vector<2x96xf32> -> vector<2x96xf32>
    %350 = vector.extract_strided_slice %319 {offsets = [0, 0], sizes = [2, 32], strides = [1, 1]} : vector<2x96xf32> to vector<2x32xf32>
    %351 = vector.extract_strided_slice %349 {offsets = [0, 0], sizes = [2, 32], strides = [1, 1]} : vector<2x96xf32> to vector<2x32xf32>
    %352 = arith.addf %350, %351 : vector<2x32xf32>
    %353 = arith.negf %352 : vector<2x32xf32>
    %354 = math.exp %353 : vector<2x32xf32>
    %cst_67 = arith.constant 1.000000e+00 : f32
    %355 = vector.broadcast %cst_67 : f32 to vector<2x32xf32>
    %356 = arith.addf %355, %354 : vector<2x32xf32>
    %357 = arith.divf %355, %356 : vector<2x32xf32>
    %358 = vector.extract_strided_slice %319 {offsets = [0, 32], sizes = [2, 32], strides = [1, 1]} : vector<2x96xf32> to vector<2x32xf32>
    %359 = vector.extract_strided_slice %349 {offsets = [0, 32], sizes = [2, 32], strides = [1, 1]} : vector<2x96xf32> to vector<2x32xf32>
    %360 = arith.addf %358, %359 : vector<2x32xf32>
    %361 = arith.negf %360 : vector<2x32xf32>
    %362 = math.exp %361 : vector<2x32xf32>
    %cst_68 = arith.constant 1.000000e+00 : f32
    %363 = vector.broadcast %cst_68 : f32 to vector<2x32xf32>
    %364 = arith.addf %363, %362 : vector<2x32xf32>
    %365 = arith.divf %363, %364 : vector<2x32xf32>
    %366 = vector.extract_strided_slice %319 {offsets = [0, 64], sizes = [2, 32], strides = [1, 1]} : vector<2x96xf32> to vector<2x32xf32>
    %367 = vector.extract_strided_slice %349 {offsets = [0, 64], sizes = [2, 32], strides = [1, 1]} : vector<2x96xf32> to vector<2x32xf32>
    %368 = vector.broadcast %15 : vector<1x32xf32> to vector<2x32xf32>
    %369 = arith.addf %367, %368 : vector<2x32xf32>
    %370 = arith.mulf %357, %369 : vector<2x32xf32>
    %371 = arith.addf %366, %370 : vector<2x32xf32>
    %372 = math.tanh %371 : vector<2x32xf32>
    %cst_69 = arith.constant 1.000000e+00 : f32
    %373 = vector.broadcast %cst_69 : f32 to vector<2x32xf32>
    %374 = arith.subf %373, %365 : vector<2x32xf32>
    %375 = arith.mulf %374, %372 : vector<2x32xf32>
    %376 = arith.mulf %365, %317 : vector<2x32xf32>
    %377 = arith.addf %375, %376 : vector<2x32xf32>
    %378 = vector.extract_strided_slice %11 {offsets = [12, 0], sizes = [2, 96], strides = [1, 1]} : vector<16x192xf32> to vector<2x96xf32>
    %379 = vector.extract_strided_slice %11 {offsets = [2, 96], sizes = [2, 96], strides = [1, 1]} : vector<16x192xf32> to vector<2x96xf32>
    %cst_70 = arith.constant dense<0.000000e+00> : vector<2x96xf32>
    %380 = tpu.matmul %348, %12, %cst_70 {dimension_numbers = #tpu.dot_dimension_numbers<[1], [0], [0], [1], [0, 0, 1, 1], [], []>} : vector<2x32xf32>, vector<32x96xf32>, vector<2x96xf32> -> vector<2x96xf32>
    %381 = vector.extract_strided_slice %378 {offsets = [0, 0], sizes = [2, 32], strides = [1, 1]} : vector<2x96xf32> to vector<2x32xf32>
    %382 = vector.extract_strided_slice %380 {offsets = [0, 0], sizes = [2, 32], strides = [1, 1]} : vector<2x96xf32> to vector<2x32xf32>
    %383 = arith.addf %381, %382 : vector<2x32xf32>
    %384 = arith.negf %383 : vector<2x32xf32>
    %385 = math.exp %384 : vector<2x32xf32>
    %cst_71 = arith.constant 1.000000e+00 : f32
    %386 = vector.broadcast %cst_71 : f32 to vector<2x32xf32>
    %387 = arith.addf %386, %385 : vector<2x32xf32>
    %388 = arith.divf %386, %387 : vector<2x32xf32>
    %389 = vector.extract_strided_slice %378 {offsets = [0, 32], sizes = [2, 32], strides = [1, 1]} : vector<2x96xf32> to vector<2x32xf32>
    %390 = vector.extract_strided_slice %380 {offsets = [0, 32], sizes = [2, 32], strides = [1, 1]} : vector<2x96xf32> to vector<2x32xf32>
    %391 = arith.addf %389, %390 : vector<2x32xf32>
    %392 = arith.negf %391 : vector<2x32xf32>
    %393 = math.exp %392 : vector<2x32xf32>
    %cst_72 = arith.constant 1.000000e+00 : f32
    %394 = vector.broadcast %cst_72 : f32 to vector<2x32xf32>
    %395 = arith.addf %394, %393 : vector<2x32xf32>
    %396 = arith.divf %394, %395 : vector<2x32xf32>
    %397 = vector.extract_strided_slice %378 {offsets = [0, 64], sizes = [2, 32], strides = [1, 1]} : vector<2x96xf32> to vector<2x32xf32>
    %398 = vector.extract_strided_slice %380 {offsets = [0, 64], sizes = [2, 32], strides = [1, 1]} : vector<2x96xf32> to vector<2x32xf32>
    %399 = vector.broadcast %14 : vector<1x32xf32> to vector<2x32xf32>
    %400 = arith.addf %398, %399 : vector<2x32xf32>
    %401 = arith.mulf %388, %400 : vector<2x32xf32>
    %402 = arith.addf %397, %401 : vector<2x32xf32>
    %403 = math.tanh %402 : vector<2x32xf32>
    %cst_73 = arith.constant 1.000000e+00 : f32
    %404 = vector.broadcast %cst_73 : f32 to vector<2x32xf32>
    %405 = arith.subf %404, %396 : vector<2x32xf32>
    %406 = arith.mulf %405, %403 : vector<2x32xf32>
    %407 = arith.mulf %396, %348 : vector<2x32xf32>
    %408 = arith.addf %406, %407 : vector<2x32xf32>
    %cst_74 = arith.constant dense<0.000000e+00> : vector<2x96xf32>
    %409 = tpu.matmul %377, %13, %cst_74 {dimension_numbers = #tpu.dot_dimension_numbers<[1], [0], [0], [1], [0, 0, 1, 1], [], []>} : vector<2x32xf32>, vector<32x96xf32>, vector<2x96xf32> -> vector<2x96xf32>
    %410 = vector.extract_strided_slice %379 {offsets = [0, 0], sizes = [2, 32], strides = [1, 1]} : vector<2x96xf32> to vector<2x32xf32>
    %411 = vector.extract_strided_slice %409 {offsets = [0, 0], sizes = [2, 32], strides = [1, 1]} : vector<2x96xf32> to vector<2x32xf32>
    %412 = arith.addf %410, %411 : vector<2x32xf32>
    %413 = arith.negf %412 : vector<2x32xf32>
    %414 = math.exp %413 : vector<2x32xf32>
    %cst_75 = arith.constant 1.000000e+00 : f32
    %415 = vector.broadcast %cst_75 : f32 to vector<2x32xf32>
    %416 = arith.addf %415, %414 : vector<2x32xf32>
    %417 = arith.divf %415, %416 : vector<2x32xf32>
    %418 = vector.extract_strided_slice %379 {offsets = [0, 32], sizes = [2, 32], strides = [1, 1]} : vector<2x96xf32> to vector<2x32xf32>
    %419 = vector.extract_strided_slice %409 {offsets = [0, 32], sizes = [2, 32], strides = [1, 1]} : vector<2x96xf32> to vector<2x32xf32>
    %420 = arith.addf %418, %419 : vector<2x32xf32>
    %421 = arith.negf %420 : vector<2x32xf32>
    %422 = math.exp %421 : vector<2x32xf32>
    %cst_76 = arith.constant 1.000000e+00 : f32
    %423 = vector.broadcast %cst_76 : f32 to vector<2x32xf32>
    %424 = arith.addf %423, %422 : vector<2x32xf32>
    %425 = arith.divf %423, %424 : vector<2x32xf32>
    %426 = vector.extract_strided_slice %379 {offsets = [0, 64], sizes = [2, 32], strides = [1, 1]} : vector<2x96xf32> to vector<2x32xf32>
    %427 = vector.extract_strided_slice %409 {offsets = [0, 64], sizes = [2, 32], strides = [1, 1]} : vector<2x96xf32> to vector<2x32xf32>
    %428 = vector.broadcast %15 : vector<1x32xf32> to vector<2x32xf32>
    %429 = arith.addf %427, %428 : vector<2x32xf32>
    %430 = arith.mulf %417, %429 : vector<2x32xf32>
    %431 = arith.addf %426, %430 : vector<2x32xf32>
    %432 = math.tanh %431 : vector<2x32xf32>
    %cst_77 = arith.constant 1.000000e+00 : f32
    %433 = vector.broadcast %cst_77 : f32 to vector<2x32xf32>
    %434 = arith.subf %433, %425 : vector<2x32xf32>
    %435 = arith.mulf %434, %432 : vector<2x32xf32>
    %436 = arith.mulf %425, %377 : vector<2x32xf32>
    %437 = arith.addf %435, %436 : vector<2x32xf32>
    %438 = vector.extract_strided_slice %11 {offsets = [14, 0], sizes = [2, 96], strides = [1, 1]} : vector<16x192xf32> to vector<2x96xf32>
    %439 = vector.extract_strided_slice %11 {offsets = [0, 96], sizes = [2, 96], strides = [1, 1]} : vector<16x192xf32> to vector<2x96xf32>
    %cst_78 = arith.constant dense<0.000000e+00> : vector<2x96xf32>
    %440 = tpu.matmul %408, %12, %cst_78 {dimension_numbers = #tpu.dot_dimension_numbers<[1], [0], [0], [1], [0, 0, 1, 1], [], []>} : vector<2x32xf32>, vector<32x96xf32>, vector<2x96xf32> -> vector<2x96xf32>
    %441 = vector.extract_strided_slice %438 {offsets = [0, 0], sizes = [2, 32], strides = [1, 1]} : vector<2x96xf32> to vector<2x32xf32>
    %442 = vector.extract_strided_slice %440 {offsets = [0, 0], sizes = [2, 32], strides = [1, 1]} : vector<2x96xf32> to vector<2x32xf32>
    %443 = arith.addf %441, %442 : vector<2x32xf32>
    %444 = arith.negf %443 : vector<2x32xf32>
    %445 = math.exp %444 : vector<2x32xf32>
    %cst_79 = arith.constant 1.000000e+00 : f32
    %446 = vector.broadcast %cst_79 : f32 to vector<2x32xf32>
    %447 = arith.addf %446, %445 : vector<2x32xf32>
    %448 = arith.divf %446, %447 : vector<2x32xf32>
    %449 = vector.extract_strided_slice %438 {offsets = [0, 32], sizes = [2, 32], strides = [1, 1]} : vector<2x96xf32> to vector<2x32xf32>
    %450 = vector.extract_strided_slice %440 {offsets = [0, 32], sizes = [2, 32], strides = [1, 1]} : vector<2x96xf32> to vector<2x32xf32>
    %451 = arith.addf %449, %450 : vector<2x32xf32>
    %452 = arith.negf %451 : vector<2x32xf32>
    %453 = math.exp %452 : vector<2x32xf32>
    %cst_80 = arith.constant 1.000000e+00 : f32
    %454 = vector.broadcast %cst_80 : f32 to vector<2x32xf32>
    %455 = arith.addf %454, %453 : vector<2x32xf32>
    %456 = arith.divf %454, %455 : vector<2x32xf32>
    %457 = vector.extract_strided_slice %438 {offsets = [0, 64], sizes = [2, 32], strides = [1, 1]} : vector<2x96xf32> to vector<2x32xf32>
    %458 = vector.extract_strided_slice %440 {offsets = [0, 64], sizes = [2, 32], strides = [1, 1]} : vector<2x96xf32> to vector<2x32xf32>
    %459 = vector.broadcast %14 : vector<1x32xf32> to vector<2x32xf32>
    %460 = arith.addf %458, %459 : vector<2x32xf32>
    %461 = arith.mulf %448, %460 : vector<2x32xf32>
    %462 = arith.addf %457, %461 : vector<2x32xf32>
    %463 = math.tanh %462 : vector<2x32xf32>
    %cst_81 = arith.constant 1.000000e+00 : f32
    %464 = vector.broadcast %cst_81 : f32 to vector<2x32xf32>
    %465 = arith.subf %464, %456 : vector<2x32xf32>
    %466 = arith.mulf %465, %463 : vector<2x32xf32>
    %467 = arith.mulf %456, %408 : vector<2x32xf32>
    %468 = arith.addf %466, %467 : vector<2x32xf32>
    %cst_82 = arith.constant dense<0.000000e+00> : vector<2x96xf32>
    %469 = tpu.matmul %437, %13, %cst_82 {dimension_numbers = #tpu.dot_dimension_numbers<[1], [0], [0], [1], [0, 0, 1, 1], [], []>} : vector<2x32xf32>, vector<32x96xf32>, vector<2x96xf32> -> vector<2x96xf32>
    %470 = vector.extract_strided_slice %439 {offsets = [0, 0], sizes = [2, 32], strides = [1, 1]} : vector<2x96xf32> to vector<2x32xf32>
    %471 = vector.extract_strided_slice %469 {offsets = [0, 0], sizes = [2, 32], strides = [1, 1]} : vector<2x96xf32> to vector<2x32xf32>
    %472 = arith.addf %470, %471 : vector<2x32xf32>
    %473 = arith.negf %472 : vector<2x32xf32>
    %474 = math.exp %473 : vector<2x32xf32>
    %cst_83 = arith.constant 1.000000e+00 : f32
    %475 = vector.broadcast %cst_83 : f32 to vector<2x32xf32>
    %476 = arith.addf %475, %474 : vector<2x32xf32>
    %477 = arith.divf %475, %476 : vector<2x32xf32>
    %478 = vector.extract_strided_slice %439 {offsets = [0, 32], sizes = [2, 32], strides = [1, 1]} : vector<2x96xf32> to vector<2x32xf32>
    %479 = vector.extract_strided_slice %469 {offsets = [0, 32], sizes = [2, 32], strides = [1, 1]} : vector<2x96xf32> to vector<2x32xf32>
    %480 = arith.addf %478, %479 : vector<2x32xf32>
    %481 = arith.negf %480 : vector<2x32xf32>
    %482 = math.exp %481 : vector<2x32xf32>
    %cst_84 = arith.constant 1.000000e+00 : f32
    %483 = vector.broadcast %cst_84 : f32 to vector<2x32xf32>
    %484 = arith.addf %483, %482 : vector<2x32xf32>
    %485 = arith.divf %483, %484 : vector<2x32xf32>
    %486 = vector.extract_strided_slice %439 {offsets = [0, 64], sizes = [2, 32], strides = [1, 1]} : vector<2x96xf32> to vector<2x32xf32>
    %487 = vector.extract_strided_slice %469 {offsets = [0, 64], sizes = [2, 32], strides = [1, 1]} : vector<2x96xf32> to vector<2x32xf32>
    %488 = vector.broadcast %15 : vector<1x32xf32> to vector<2x32xf32>
    %489 = arith.addf %487, %488 : vector<2x32xf32>
    %490 = arith.mulf %477, %489 : vector<2x32xf32>
    %491 = arith.addf %486, %490 : vector<2x32xf32>
    %492 = math.tanh %491 : vector<2x32xf32>
    %cst_85 = arith.constant 1.000000e+00 : f32
    %493 = vector.broadcast %cst_85 : f32 to vector<2x32xf32>
    %494 = arith.subf %493, %485 : vector<2x32xf32>
    %495 = arith.mulf %494, %492 : vector<2x32xf32>
    %496 = arith.mulf %485, %437 : vector<2x32xf32>
    %497 = arith.addf %495, %496 : vector<2x32xf32>
    %498 = tpu.concatenate %48, %497 in 1 : vector<2x32xf32>, vector<2x32xf32> -> vector<2x64xf32>
    %499 = tpu.concatenate %108, %437 in 1 : vector<2x32xf32>, vector<2x32xf32> -> vector<2x64xf32>
    %500 = tpu.concatenate %168, %377 in 1 : vector<2x32xf32>, vector<2x32xf32> -> vector<2x64xf32>
    %501 = tpu.concatenate %228, %317 in 1 : vector<2x32xf32>, vector<2x32xf32> -> vector<2x64xf32>
    %502 = tpu.concatenate %288, %257 in 1 : vector<2x32xf32>, vector<2x32xf32> -> vector<2x64xf32>
    %503 = tpu.concatenate %348, %197 in 1 : vector<2x32xf32>, vector<2x32xf32> -> vector<2x64xf32>
    %504 = tpu.concatenate %408, %137 in 1 : vector<2x32xf32>, vector<2x32xf32> -> vector<2x64xf32>
    %505 = tpu.concatenate %468, %77 in 1 : vector<2x32xf32>, vector<2x32xf32> -> vector<2x64xf32>
    %506 = tpu.concatenate %498, %499, %500, %501, %502, %503, %504, %505 in 0 : vector<2x64xf32>, vector<2x64xf32>, vector<2x64xf32>, vector<2x64xf32>, vector<2x64xf32>, vector<2x64xf32>, vector<2x64xf32>, vector<2x64xf32> -> vector<16x64xf32>
    %c0_86 = arith.constant 0 : index
    %c0_87 = arith.constant 0 : index
    %507 = vector.load %arg11[%c0_86, %c0_87] : memref<16x64xf32, #tpu.memory_space<vmem>>, vector<16x64xf32>
    tpu.vector_store %arg11[%c0_86, %c0_87], %506 {strides = array<i32>} : memref<16x64xf32, #tpu.memory_space<vmem>>, vector<16x64xf32>,
    %508 = tpu.concatenate %468, %497 in 0 : vector<2x32xf32>, vector<2x32xf32> -> vector<4x32xf32>
    %c0_88 = arith.constant 0 : index
    %c0_89 = arith.constant 0 : index
    %509 = vector.load %arg12[%c0_88, %c0_89] : memref<4x32xf32, #tpu.memory_space<vmem>>, vector<4x32xf32>
    tpu.vector_store %arg12[%c0_88, %c0_89], %508 {strides = array<i32>} : memref<4x32xf32, #tpu.memory_space<vmem>>, vector<4x32xf32>,
    %510 = tpu.concatenate %468, %497 in 1 : vector<2x32xf32>, vector<2x32xf32> -> vector<2x64xf32>
    %c0_90 = arith.constant 0 : index
    %c0_91 = arith.constant 0 : index
    %511 = vector.load %arg13[%c0_90, %c0_91] : memref<2x64xf32, #tpu.memory_space<vmem>>, vector<2x64xf32>
    tpu.vector_store %arg13[%c0_90, %c0_91], %510 {strides = array<i32>} : memref<2x64xf32, #tpu.memory_space<vmem>>, vector<2x64xf32>,
    return
  }
}

</mosaic_0001>

<llo_original>
// kernel: word_att_net.1
$region0: #{word_att_net.1}
  #allocation0 [shape = 'u32[]', space=smem, size = 0x4, offset = 0x4, fixed_abs, tag = 'smem constant byte address 0x4 - core index']
  #allocation1 [shape = 'u32[72,128]{1,0:T(1,128)}', space=vmem, size = 0x9000, scoped, tag = 'internal scratch']
  %s0 = inlined_call_operand.vmem [shape: bf16[16,384], index: 0, kind: input, shape index: {}]
  %s1 = inlined_call_operand.vmem [shape: bf16[384,384], index: 1, kind: input, shape index: {}]
  %s2 = inlined_call_operand.vmem [shape: f32[1,384], index: 2, kind: input, shape index: {}]
  %s3 = inlined_call_operand.vmem [shape: bf16[384,192], index: 3, kind: input, shape index: {}]
  %s4 = inlined_call_operand.vmem [shape: f32[1,192], index: 4, kind: input, shape index: {}]
  %s5 = inlined_call_operand.vmem [shape: f32[32,96], index: 5, kind: input, shape index: {}]
  %s6 = inlined_call_operand.vmem [shape: f32[32,96], index: 6, kind: input, shape index: {}]
  %s7 = inlined_call_operand.vmem [shape: f32[1,32], index: 7, kind: input, shape index: {}]
  %s8 = inlined_call_operand.vmem [shape: f32[1,32], index: 8, kind: input, shape index: {}]
  %s9 = inlined_call_operand.vmem [shape: f32[2,32], index: 9, kind: input, shape index: {}]
  %s10 = inlined_call_operand.vmem [shape: f32[2,32], index: 10, kind: input, shape index: {}]
  %s11 = inlined_call_operand.hbm [shape: f32[16,64], index: 11, kind: output, shape index: {0}]
  %s12 = inlined_call_operand.hbm [shape: f32[4,32], index: 12, kind: output, shape index: {1}]
  %s13 = inlined_call_operand.hbm [shape: f32[2,64], index: 13, kind: output, shape index: {2}]
  %14 = xla_tuple %s11, %s12, %s13
  %s15 = sld [smem:[#allocation0]]
  $region70: #{word_att_net.1} parent=0
    _
  %s17 = ssub.s32 1, %s15
  %s18 = scalar_select 0, %s17, %s15
  $region1: #{word_att_net.1} parent=0
    #allocation2 [shape = 'u8[8192]{0}', space=vmem, size = 0x2000, scoped, tag = 'output window, operand 0, single buffered']
    #allocation3 [shape = 's32[1]{0}', space=sflag, size = 0x4, scoped, tag = 'scoped memory for word_att_net.1']
    #allocation4 [shape = 'u8[2048]{0}', space=vmem, size = 0x800, scoped, tag = 'output window, operand 1, single buffered']
    #allocation5 [shape = 's32[1]{0}', space=sflag, size = 0x4, scoped, tag = 'scoped memory for word_att_net.1']
    #allocation6 [shape = 'u8[1024]{0}', space=vmem, size = 0x400, scoped, tag = 'output window, operand 2, single buffered']
    %19 = vsyncpa [#allocation3], 0
    %20 = vsyncpa [#allocation5], 0
    // Predicated region
    $region2: #{word_att_net.1} parent=1 // pred_check
      _
    $region3: #{word_att_net.1} parent=1 // pred_check_branch
      %22 = sbr.rel (0) target = $region5
    $region4: #{word_att_net.1} parent=1 // pred_region
      _
    $region5: #{word_att_net.1} parent=1 // pred_fallthru
      _
    // Predicated region
    $region6: #{word_att_net.1} parent=1 // pred_check
      _
    $region7: #{word_att_net.1} parent=1 // pred_check_branch
      %24 = sbr.rel (0) target = $region9
    $region8: #{word_att_net.1} parent=1 // pred_region
      _
    $region9: #{word_att_net.1} parent=1 // pred_fallthru
      _
    // Predicated region
    $region10: #{word_att_net.1} parent=1 // pred_check
      _
    $region11: #{word_att_net.1} parent=1 // pred_check_branch
      %26 = sbr.rel (0) target = $region13
    $region12: #{word_att_net.1} parent=1 // pred_region
      _
    $region13: #{word_att_net.1} parent=1 // pred_fallthru
      _
    // Predicated region
    $region14: #{word_att_net.1} parent=1 // pred_check
      _
    $region15: #{word_att_net.1} parent=1 // pred_check_branch
      %28 = sbr.rel (0) target = $region17
    $region16: #{word_att_net.1} parent=1 // pred_region
      _
    $region17: #{word_att_net.1} parent=1 // pred_fallthru
      _
    // Predicated region
    $region18: #{word_att_net.1} parent=1 // pred_check
      _
    $region19: #{word_att_net.1} parent=1 // pred_check_branch
      %30 = sbr.rel (0) target = $region21
    $region20: #{word_att_net.1} parent=1 // pred_region
      _
    $region21: #{word_att_net.1} parent=1 // pred_fallthru
      _
    // Predicated region
    $region22: #{word_att_net.1} parent=1 // pred_check
      _
    $region23: #{word_att_net.1} parent=1 // pred_check_branch
      %32 = sbr.rel (0) target = $region25
    $region24: #{word_att_net.1} parent=1 // pred_region
      _
    $region25: #{word_att_net.1} parent=1 // pred_fallthru
      _
    // Predicated region
    $region26: #{word_att_net.1} parent=1 // pred_check
      _
    $region27: #{word_att_net.1} parent=1 // pred_check_branch
      %34 = sbr.rel (0) target = $region29
    $region28: #{word_att_net.1} parent=1 // pred_region
      _
    $region29: #{word_att_net.1} parent=1 // pred_fallthru
      _
    // Predicated region
    $region30: #{word_att_net.1} parent=1 // pred_check
      _
    $region31: #{word_att_net.1} parent=1 // pred_check_branch
      %36 = sbr.rel (0) target = $region33
    $region32: #{word_att_net.1} parent=1 // pred_region
      _
    $region33: #{word_att_net.1} parent=1 // pred_fallthru
      _
    // Predicated region
    $region34: #{word_att_net.1} parent=1 // pred_check
      _
    $region35: #{word_att_net.1} parent=1 // pred_check_branch
      %38 = sbr.rel (0) target = $region37
    $region36: #{word_att_net.1} parent=1 // pred_region
      _
    $region37: #{word_att_net.1} parent=1 // pred_fallthru
      _
    // Predicated region
    $region38: #{word_att_net.1} parent=1 // pred_check
      _
    $region39: #{word_att_net.1} parent=1 // pred_check_branch
      %40 = sbr.rel (0) target = $region41
    $region40: #{word_att_net.1} parent=1 // pred_region
      _
    $region41: #{word_att_net.1} parent=1 // pred_fallthru
      _
    // Predicated region
    $region42: #{word_att_net.1} parent=1 // pred_check
      _
    $region43: #{word_att_net.1} parent=1 // pred_check_branch
      %42 = sbr.rel (0) target = $region45
    $region44: #{word_att_net.1} parent=1 // pred_region
      _
    $region45: #{word_att_net.1} parent=1 // pred_fallthru
      _
    %v43 = vld [vmem:[%s0] sm:$0xff]
    %v44 = vld [vmem:[%s0 + $0x8] sm:$0xf]
    %v45 = vld [vmem:[%s0 + $0xc] sm:$0xff]
    %v46 = vld [vmem:[%s0 + $0x14] sm:$0xf]
    %v47 = vld [vmem:[%s1] sm:$0xff]
    %v48 = vld [vmem:[%s1 + $0x8] sm:$0xf]
    %v49 = vld [vmem:[%s1 + $0xc] sm:$0xff]
    %v50 = vld [vmem:[%s1 + $0x14] sm:$0xf]
    %v51 = vld [vmem:[%s1 + $0x18] sm:$0xff]
    %v52 = vld [vmem:[%s1 + $0x20] sm:$0xf]
    %v53 = vld [vmem:[%s1 + $0x24] sm:$0xff]
    %v54 = vld [vmem:[%s1 + $0x2c] sm:$0xf]
    %v55 = vld [vmem:[%s1 + $0x30] sm:$0xff]
    %v56 = vld [vmem:[%s1 + $0x38] sm:$0xf]
    %v57 = vld [vmem:[%s1 + $0x3c] sm:$0xff]
    %v58 = vld [vmem:[%s1 + $0x44] sm:$0xf]
    %v59 = vld [vmem:[%s1 + $0x48] sm:$0xff]
    %v60 = vld [vmem:[%s1 + $0x50] sm:$0xf]
    %v61 = vld [vmem:[%s1 + $0x54] sm:$0xff]
    %v62 = vld [vmem:[%s1 + $0x5c] sm:$0xf]
    %v63 = vld [vmem:[%s1 + $0x60] sm:$0xff]
    %v64 = vld [vmem:[%s1 + $0x68] sm:$0xf]
    %v65 = vld [vmem:[%s1 + $0x6c] sm:$0xff]
    %v66 = vld [vmem:[%s1 + $0x74] sm:$0xf]
    %v67 = vld [vmem:[%s1 + $0x78] sm:$0xff]
    %v68 = vld [vmem:[%s1 + $0x80] sm:$0xf]
    %v69 = vld [vmem:[%s1 + $0x84] sm:$0xff]
    %v70 = vld [vmem:[%s1 + $0x8c] sm:$0xf]
    %v71 = vld [vmem:[%s1 + $0x90] sm:$0xff]
    %v72 = vld [vmem:[%s1 + $0x98] sm:$0xf]
    %v73 = vld [vmem:[%s1 + $0x9c] sm:$0xff]
    %v74 = vld [vmem:[%s1 + $0xa4] sm:$0xf]
    %v75 = vld [vmem:[%s1 + $0xa8] sm:$0xff]
    %v76 = vld [vmem:[%s1 + $0xb0] sm:$0xf]
    %v77 = vld [vmem:[%s1 + $0xb4] sm:$0xff]
    %v78 = vld [vmem:[%s1 + $0xbc] sm:$0xf]
    %v79 = vld [vmem:[%s1 + $0xc0] sm:$0xff]
    %v80 = vld [vmem:[%s1 + $0xc8] sm:$0xf]
    %v81 = vld [vmem:[%s1 + $0xcc] sm:$0xff]
    %v82 = vld [vmem:[%s1 + $0xd4] sm:$0xf]
    %v83 = vld [vmem:[%s1 + $0xd8] sm:$0xff]
    %v84 = vld [vmem:[%s1 + $0xe0] sm:$0xf]
    %v85 = vld [vmem:[%s1 + $0xe4] sm:$0xff]
    %v86 = vld [vmem:[%s1 + $0xec] sm:$0xf]
    %v87 = vld [vmem:[%s1 + $0xf0] sm:$0xff]
    %v88 = vld [vmem:[%s1 + $0xf8] sm:$0xf]
    %v89 = vld [vmem:[%s1 + $0xfc] sm:$0xff]
    %v90 = vld [vmem:[%s1 + $0x104] sm:$0xf]
    %v91 = vld [vmem:[%s1 + $0x108] sm:$0xff]
    %v92 = vld [vmem:[%s1 + $0x110] sm:$0xf]
    %v93 = vld [vmem:[%s1 + $0x114] sm:$0xff]
    %v94 = vld [vmem:[%s1 + $0x11c] sm:$0xf]
    %v95 = vld [vmem:[%s1 + $0x120] sm:$0xff]
    %v96 = vld [vmem:[%s1 + $0x128] sm:$0xf]
    %v97 = vld [vmem:[%s1 + $0x12c] sm:$0xff]
    %v98 = vld [vmem:[%s1 + $0x134] sm:$0xf]
    %v99 = vld [vmem:[%s1 + $0x138] sm:$0xff]
    %v100 = vld [vmem:[%s1 + $0x140] sm:$0xf]
    %v101 = vld [vmem:[%s1 + $0x144] sm:$0xff]
    %v102 = vld [vmem:[%s1 + $0x14c] sm:$0xf]
    %v103 = vld [vmem:[%s1 + $0x150] sm:$0xff]
    %v104 = vld [vmem:[%s1 + $0x158] sm:$0xf]
    %v105 = vld [vmem:[%s1 + $0x15c] sm:$0xff]
    %v106 = vld [vmem:[%s1 + $0x164] sm:$0xf]
    %v107 = vld [vmem:[%s1 + $0x168] sm:$0xff]
    %v108 = vld [vmem:[%s1 + $0x170] sm:$0xf]
    %v109 = vld [vmem:[%s1 + $0x174] sm:$0xff]
    %v110 = vld [vmem:[%s1 + $0x17c] sm:$0xf]
    %v111 = vld [vmem:[%s1 + $0x180] sm:$0xff]
    %v112 = vld [vmem:[%s1 + $0x188] sm:$0xf]
    %v113 = vld [vmem:[%s1 + $0x18c] sm:$0xff]
    %v114 = vld [vmem:[%s1 + $0x194] sm:$0xf]
    %v115 = vld [vmem:[%s1 + $0x198] sm:$0xff]
    %v116 = vld [vmem:[%s1 + $0x1a0] sm:$0xf]
    %v117 = vld [vmem:[%s1 + $0x1a4] sm:$0xff]
    %v118 = vld [vmem:[%s1 + $0x1ac] sm:$0xf]
    %v119 = vld [vmem:[%s1 + $0x1b0] sm:$0xff]
    %v120 = vld [vmem:[%s1 + $0x1b8] sm:$0xf]
    %v121 = vld [vmem:[%s1 + $0x1bc] sm:$0xff]
    %v122 = vld [vmem:[%s1 + $0x1c4] sm:$0xf]
    %v123 = vld [vmem:[%s1 + $0x1c8] sm:$0xff]
    %v124 = vld [vmem:[%s1 + $0x1d0] sm:$0xf]
    %v125 = vld [vmem:[%s1 + $0x1d4] sm:$0xff]
    %v126 = vld [vmem:[%s1 + $0x1dc] sm:$0xf]
    %v127 = vld [vmem:[%s1 + $0x1e0] sm:$0xff]
    %v128 = vld [vmem:[%s1 + $0x1e8] sm:$0xf]
    %v129 = vld [vmem:[%s1 + $0x1ec] sm:$0xff]
    %v130 = vld [vmem:[%s1 + $0x1f4] sm:$0xf]
    %v131 = vld [vmem:[%s1 + $0x1f8] sm:$0xff]
    %v132 = vld [vmem:[%s1 + $0x200] sm:$0xf]
    %v133 = vld [vmem:[%s1 + $0x204] sm:$0xff]
    %v134 = vld [vmem:[%s1 + $0x20c] sm:$0xf]
    %v135 = vld [vmem:[%s1 + $0x210] sm:$0xff]
    %v136 = vld [vmem:[%s1 + $0x218] sm:$0xf]
    %v137 = vld [vmem:[%s1 + $0x21c] sm:$0xff]
    %v138 = vld [vmem:[%s1 + $0x224] sm:$0xf]
    %v139 = vld [vmem:[%s1 + $0x228] sm:$0xff]
    %v140 = vld [vmem:[%s1 + $0x230] sm:$0xf]
    %v141 = vld [vmem:[%s1 + $0x234] sm:$0xff]
    %v142 = vld [vmem:[%s1 + $0x23c] sm:$0xf]
    %v143 = vld [vmem:[%s2] sm:$0x7]
    %v145 = vperm.slane %v143, 0
    %v146 = vperm.slane %v143, 1
    %v147 = vperm.slane %v143, 2
    %v155 = vunpack.c.l.b16 %v43
    %v156 = vunpack.c.h.b16 %v43
    %v157 = vunpack.c.l.b16 %v44
    %v158 = vunpack.c.l.b16 %v45
    %v159 = vunpack.c.h.b16 %v45
    %v160 = vunpack.c.l.b16 %v46
    %v161 = vpack.c.b16 %v158, %v155
    %v162 = vpack.c.b16 %v159, %v156
    %v163 = vpack.c.b16 %v160, %v157
    %v263 = vunpack.c.l.b16 %v47
    %v264 = vunpack.c.h.b16 %v47
    %v265 = vunpack.c.l.b16 %v48
    %v266 = vunpack.c.l.b16 %v49
    %v267 = vunpack.c.h.b16 %v49
    %v268 = vunpack.c.l.b16 %v50
    %v269 = vunpack.c.l.b16 %v51
    %v270 = vunpack.c.h.b16 %v51
    %v271 = vunpack.c.l.b16 %v52
    %v272 = vunpack.c.l.b16 %v53
    %v273 = vunpack.c.h.b16 %v53
    %v274 = vunpack.c.l.b16 %v54
    %v275 = vunpack.c.l.b16 %v55
    %v276 = vunpack.c.h.b16 %v55
    %v277 = vunpack.c.l.b16 %v56
    %v278 = vunpack.c.l.b16 %v57
    %v279 = vunpack.c.h.b16 %v57
    %v280 = vunpack.c.l.b16 %v58
    %v281 = vunpack.c.l.b16 %v59
    %v282 = vunpack.c.h.b16 %v59
    %v283 = vunpack.c.l.b16 %v60
    %v284 = vunpack.c.l.b16 %v61
    %v285 = vunpack.c.h.b16 %v61
    %v286 = vunpack.c.l.b16 %v62
    %v287 = vunpack.c.l.b16 %v63
    %v288 = vunpack.c.h.b16 %v63
    %v289 = vunpack.c.l.b16 %v64
    %v290 = vunpack.c.l.b16 %v65
    %v291 = vunpack.c.h.b16 %v65
    %v292 = vunpack.c.l.b16 %v66
    %v293 = vunpack.c.l.b16 %v67
    %v294 = vunpack.c.h.b16 %v67
    %v295 = vunpack.c.l.b16 %v68
    %v296 = vunpack.c.l.b16 %v69
    %v297 = vunpack.c.h.b16 %v69
    %v298 = vunpack.c.l.b16 %v70
    %v299 = vunpack.c.l.b16 %v71
    %v300 = vunpack.c.h.b16 %v71
    %v301 = vunpack.c.l.b16 %v72
    %v302 = vunpack.c.l.b16 %v73
    %v303 = vunpack.c.h.b16 %v73
    %v304 = vunpack.c.l.b16 %v74
    %v305 = vunpack.c.l.b16 %v75
    %v306 = vunpack.c.h.b16 %v75
    %v307 = vunpack.c.l.b16 %v76
    %v308 = vunpack.c.l.b16 %v77
    %v309 = vunpack.c.h.b16 %v77
    %v310 = vunpack.c.l.b16 %v78
    %v311 = vunpack.c.l.b16 %v79
    %v312 = vunpack.c.h.b16 %v79
    %v313 = vunpack.c.l.b16 %v80
    %v314 = vunpack.c.l.b16 %v81
    %v315 = vunpack.c.h.b16 %v81
    %v316 = vunpack.c.l.b16 %v82
    %v317 = vunpack.c.l.b16 %v83
    %v318 = vunpack.c.h.b16 %v83
    %v319 = vunpack.c.l.b16 %v84
    %v320 = vunpack.c.l.b16 %v85
    %v321 = vunpack.c.h.b16 %v85
    %v322 = vunpack.c.l.b16 %v86
    %v323 = vunpack.c.l.b16 %v87
    %v324 = vunpack.c.h.b16 %v87
    %v325 = vunpack.c.l.b16 %v88
    %v326 = vunpack.c.l.b16 %v89
    %v327 = vunpack.c.h.b16 %v89
    %v328 = vunpack.c.l.b16 %v90
    %v329 = vunpack.c.l.b16 %v91
    %v330 = vunpack.c.h.b16 %v91
    %v331 = vunpack.c.l.b16 %v92
    %v332 = vunpack.c.l.b16 %v93
    %v333 = vunpack.c.h.b16 %v93
    %v334 = vunpack.c.l.b16 %v94
    %v335 = vunpack.c.l.b16 %v95
    %v336 = vunpack.c.h.b16 %v95
    %v337 = vunpack.c.l.b16 %v96
    %v338 = vunpack.c.l.b16 %v97
    %v339 = vunpack.c.h.b16 %v97
    %v340 = vunpack.c.l.b16 %v98
    %v341 = vunpack.c.l.b16 %v99
    %v342 = vunpack.c.h.b16 %v99
    %v343 = vunpack.c.l.b16 %v100
    %v344 = vunpack.c.l.b16 %v101
    %v345 = vunpack.c.h.b16 %v101
    %v346 = vunpack.c.l.b16 %v102
    %v347 = vunpack.c.l.b16 %v103
    %v348 = vunpack.c.h.b16 %v103
    %v349 = vunpack.c.l.b16 %v104
    %v350 = vunpack.c.l.b16 %v105
    %v351 = vunpack.c.h.b16 %v105
    %v352 = vunpack.c.l.b16 %v106
    %v353 = vunpack.c.l.b16 %v107
    %v354 = vunpack.c.h.b16 %v107
    %v355 = vunpack.c.l.b16 %v108
    %v356 = vunpack.c.l.b16 %v109
    %v357 = vunpack.c.h.b16 %v109
    %v358 = vunpack.c.l.b16 %v110
    %v359 = vunpack.c.l.b16 %v111
    %v360 = vunpack.c.h.b16 %v111
    %v361 = vunpack.c.l.b16 %v112
    %v362 = vunpack.c.l.b16 %v113
    %v363 = vunpack.c.h.b16 %v113
    %v364 = vunpack.c.l.b16 %v114
    %v365 = vunpack.c.l.b16 %v115
    %v366 = vunpack.c.h.b16 %v115
    %v367 = vunpack.c.l.b16 %v116
    %v368 = vunpack.c.l.b16 %v117
    %v369 = vunpack.c.h.b16 %v117
    %v370 = vunpack.c.l.b16 %v118
    %v371 = vunpack.c.l.b16 %v119
    %v372 = vunpack.c.h.b16 %v119
    %v373 = vunpack.c.l.b16 %v120
    %v374 = vunpack.c.l.b16 %v121
    %v375 = vunpack.c.h.b16 %v121
    %v376 = vunpack.c.l.b16 %v122
    %v377 = vunpack.c.l.b16 %v123
    %v378 = vunpack.c.h.b16 %v123
    %v379 = vunpack.c.l.b16 %v124
    %v380 = vunpack.c.l.b16 %v125
    %v381 = vunpack.c.h.b16 %v125
    %v382 = vunpack.c.l.b16 %v126
    %v383 = vunpack.c.l.b16 %v127
    %v384 = vunpack.c.h.b16 %v127
    %v385 = vunpack.c.l.b16 %v128
    %v386 = vunpack.c.l.b16 %v129
    %v387 = vunpack.c.h.b16 %v129
    %v388 = vunpack.c.l.b16 %v130
    %v389 = vunpack.c.l.b16 %v131
    %v390 = vunpack.c.h.b16 %v131
    %v391 = vunpack.c.l.b16 %v132
    %v392 = vunpack.c.l.b16 %v133
    %v393 = vunpack.c.h.b16 %v133
    %v394 = vunpack.c.l.b16 %v134
    %v395 = vunpack.c.l.b16 %v135
    %v396 = vunpack.c.h.b16 %v135
    %v397 = vunpack.c.l.b16 %v136
    %v398 = vunpack.c.l.b16 %v137
    %v399 = vunpack.c.h.b16 %v137
    %v400 = vunpack.c.l.b16 %v138
    %v401 = vunpack.c.l.b16 %v139
    %v402 = vunpack.c.h.b16 %v139
    %v403 = vunpack.c.l.b16 %v140
    %v404 = vunpack.c.l.b16 %v141
    %v405 = vunpack.c.h.b16 %v141
    %v406 = vunpack.c.l.b16 %v142
    %v407 = vpack.c.b16 %v266, %v263
    %v408 = vpack.c.b16 %v267, %v264
    %v409 = vpack.c.b16 %v268, %v265
    %v410 = vpack.c.b16 %v272, %v269
    %v411 = vpack.c.b16 %v273, %v270
    %v412 = vpack.c.b16 %v274, %v271
    %v413 = vpack.c.b16 %v278, %v275
    %v414 = vpack.c.b16 %v279, %v276
    %v415 = vpack.c.b16 %v280, %v277
    %v416 = vpack.c.b16 %v284, %v281
    %v417 = vpack.c.b16 %v285, %v282
    %v418 = vpack.c.b16 %v286, %v283
    %v419 = vpack.c.b16 %v290, %v287
    %v420 = vpack.c.b16 %v291, %v288
    %v421 = vpack.c.b16 %v292, %v289
    %v422 = vpack.c.b16 %v296, %v293
    %v423 = vpack.c.b16 %v297, %v294
    %v424 = vpack.c.b16 %v298, %v295
    %v425 = vpack.c.b16 %v302, %v299
    %v426 = vpack.c.b16 %v303, %v300
    %v427 = vpack.c.b16 %v304, %v301
    %v428 = vpack.c.b16 %v308, %v305
    %v429 = vpack.c.b16 %v309, %v306
    %v430 = vpack.c.b16 %v310, %v307
    %v431 = vpack.c.b16 %v314, %v311
    %v432 = vpack.c.b16 %v315, %v312
    %v433 = vpack.c.b16 %v316, %v313
    %v434 = vpack.c.b16 %v320, %v317
    %v435 = vpack.c.b16 %v321, %v318
    %v436 = vpack.c.b16 %v322, %v319
    %v437 = vpack.c.b16 %v326, %v323
    %v438 = vpack.c.b16 %v327, %v324
    %v439 = vpack.c.b16 %v328, %v325
    %v440 = vpack.c.b16 %v332, %v329
    %v441 = vpack.c.b16 %v333, %v330
    %v442 = vpack.c.b16 %v334, %v331
    %v443 = vpack.c.b16 %v338, %v335
    %v444 = vpack.c.b16 %v339, %v336
    %v445 = vpack.c.b16 %v340, %v337
    %v446 = vpack.c.b16 %v344, %v341
    %v447 = vpack.c.b16 %v345, %v342
    %v448 = vpack.c.b16 %v346, %v343
    %v449 = vpack.c.b16 %v350, %v347
    %v450 = vpack.c.b16 %v351, %v348
    %v451 = vpack.c.b16 %v352, %v349
    %v452 = vpack.c.b16 %v356, %v353
    %v453 = vpack.c.b16 %v357, %v354
    %v454 = vpack.c.b16 %v358, %v355
    %v455 = vpack.c.b16 %v362, %v359
    %v456 = vpack.c.b16 %v363, %v360
    %v457 = vpack.c.b16 %v364, %v361
    %v458 = vpack.c.b16 %v368, %v365
    %v459 = vpack.c.b16 %v369, %v366
    %v460 = vpack.c.b16 %v370, %v367
    %v461 = vpack.c.b16 %v374, %v371
    %v462 = vpack.c.b16 %v375, %v372
    %v463 = vpack.c.b16 %v376, %v373
    %v464 = vpack.c.b16 %v380, %v377
    %v465 = vpack.c.b16 %v381, %v378
    %v466 = vpack.c.b16 %v382, %v379
    %v467 = vpack.c.b16 %v386, %v383
    %v468 = vpack.c.b16 %v387, %v384
    %v469 = vpack.c.b16 %v388, %v385
    %v470 = vpack.c.b16 %v392, %v389
    %v471 = vpack.c.b16 %v393, %v390
    %v472 = vpack.c.b16 %v394, %v391
    %v473 = vpack.c.b16 %v398, %v395
    %v474 = vpack.c.b16 %v399, %v396
    %v475 = vpack.c.b16 %v400, %v397
    %v476 = vpack.c.b16 %v404, %v401
    %v477 = vpack.c.b16 %v405, %v402
    %v478 = vpack.c.b16 %v406, %v403
    %551 = vmatpush.bf16.msra.mxu0 %v428
    %552 = vmatpush.bf16.msra.mxu0 %v425
    %553 = vmatpush.bf16.msra.mxu0 %v422
    %554 = vmatpush.bf16.msra.mxu0 %v419
    %555 = vmatpush.bf16.msra.mxu0 %v416
    %556 = vmatpush.bf16.msra.mxu0 %v413
    %557 = vmatpush.bf16.msra.mxu0 %v410
    %558 = vmatpush.bf16.msra.mxu0 %v407
    %559 = vmatmul.bf16.gmra.mxu0 %v161
    %v560 = vpop.f32.mrf.mxu0
    %v561 = vadd.f32 %v145, %v560
    %v562 = vpop.f32.mrf.mxu0
    %v563 = vadd.f32 %v145, %v562
    %564 = vdwg.mxu0
    %565 = vmatpush.bf16.msra.mxu0 %v452
    %566 = vmatpush.bf16.msra.mxu0 %v449
    %567 = vmatpush.bf16.msra.mxu0 %v446
    %568 = vmatpush.bf16.msra.mxu0 %v443
    %569 = vmatpush.bf16.msra.mxu0 %v440
    %570 = vmatpush.bf16.msra.mxu0 %v437
    %571 = vmatpush.bf16.msra.mxu0 %v434
    %572 = vmatpush.bf16.msra.mxu0 %v431
    %573 = vmatmul.bf16.gmra.mxu0 %v162
    %v574 = vpop.f32.mrf.mxu0
    %v575 = vadd.f32 %v561, %v574
    %v576 = vpop.f32.mrf.mxu0
    %v577 = vadd.f32 %v563, %v576
    %578 = vdwg.mxu0
    %579 = vmatpush.bf16.msra.mxu0 %v476
    %580 = vmatpush.bf16.msra.mxu0 %v473
    %581 = vmatpush.bf16.msra.mxu0 %v470
    %582 = vmatpush.bf16.msra.mxu0 %v467
    %583 = vmatpush.bf16.msra.mxu0 %v464
    %584 = vmatpush.bf16.msra.mxu0 %v461
    %585 = vmatpush.bf16.msra.mxu0 %v458
    %586 = vmatpush.bf16.msra.mxu0 %v455
    %587 = vmatmul.bf16.gmra.mxu0 %v163
    %v588 = vpop.f32.mrf.mxu0
    %v589 = vadd.f32 %v575, %v588
    %v590 = vpop.f32.mrf.mxu0
    %v591 = vadd.f32 %v577, %v590
    %592 = vdwg.mxu0
    %593 = vmatpush.bf16.msra.mxu0 %v429
    %594 = vmatpush.bf16.msra.mxu0 %v426
    %595 = vmatpush.bf16.msra.mxu0 %v423
    %596 = vmatpush.bf16.msra.mxu0 %v420
    %597 = vmatpush.bf16.msra.mxu0 %v417
    %598 = vmatpush.bf16.msra.mxu0 %v414
    %599 = vmatpush.bf16.msra.mxu0 %v411
    %600 = vmatpush.bf16.msra.mxu0 %v408
    %601 = vmatmul.bf16.gmra.mxu0 %v161
    %v602 = vpop.f32.mrf.mxu0
    %v603 = vadd.f32 %v146, %v602
    %v604 = vpop.f32.mrf.mxu0
    %v605 = vadd.f32 %v146, %v604
    %606 = vdwg.mxu0
    %607 = vmatpush.bf16.msra.mxu0 %v453
    %608 = vmatpush.bf16.msra.mxu0 %v450
    %609 = vmatpush.bf16.msra.mxu0 %v447
    %610 = vmatpush.bf16.msra.mxu0 %v444
    %611 = vmatpush.bf16.msra.mxu0 %v441
    %612 = vmatpush.bf16.msra.mxu0 %v438
    %613 = vmatpush.bf16.msra.mxu0 %v435
    %614 = vmatpush.bf16.msra.mxu0 %v432
    %615 = vmatmul.bf16.gmra.mxu0 %v162
    %v616 = vpop.f32.mrf.mxu0
    %v617 = vadd.f32 %v603, %v616
    %v618 = vpop.f32.mrf.mxu0
    %v619 = vadd.f32 %v605, %v618
    %620 = vdwg.mxu0
    %621 = vmatpush.bf16.msra.mxu0 %v477
    %622 = vmatpush.bf16.msra.mxu0 %v474
    %623 = vmatpush.bf16.msra.mxu0 %v471
    %624 = vmatpush.bf16.msra.mxu0 %v468
    %625 = vmatpush.bf16.msra.mxu0 %v465
    %626 = vmatpush.bf16.msra.mxu0 %v462
    %627 = vmatpush.bf16.msra.mxu0 %v459
    %628 = vmatpush.bf16.msra.mxu0 %v456
    %629 = vmatmul.bf16.gmra.mxu0 %v163
    %v630 = vpop.f32.mrf.mxu0
    %v631 = vadd.f32 %v617, %v630
    %v632 = vpop.f32.mrf.mxu0
    %v633 = vadd.f32 %v619, %v632
    %634 = vdwg.mxu0
    %635 = vmatpush.bf16.msra.mxu0 %v430
    %636 = vmatpush.bf16.msra.mxu0 %v427
    %637 = vmatpush.bf16.msra.mxu0 %v424
    %638 = vmatpush.bf16.msra.mxu0 %v421
    %639 = vmatpush.bf16.msra.mxu0 %v418
    %640 = vmatpush.bf16.msra.mxu0 %v415
    %641 = vmatpush.bf16.msra.mxu0 %v412
    %642 = vmatpush.bf16.msra.mxu0 %v409
    %643 = vmatmul.bf16.gmra.mxu0 %v161
    %v644 = vpop.f32.mrf.mxu0
    %v645 = vadd.f32 %v147, %v644
    %v646 = vpop.f32.mrf.mxu0
    %v647 = vadd.f32 %v147, %v646
    %648 = vdwg.mxu0
    %649 = vmatpush.bf16.msra.mxu0 %v454
    %650 = vmatpush.bf16.msra.mxu0 %v451
    %651 = vmatpush.bf16.msra.mxu0 %v448
    %652 = vmatpush.bf16.msra.mxu0 %v445
    %653 = vmatpush.bf16.msra.mxu0 %v442
    %654 = vmatpush.bf16.msra.mxu0 %v439
    %655 = vmatpush.bf16.msra.mxu0 %v436
    %656 = vmatpush.bf16.msra.mxu0 %v433
    %657 = vmatmul.bf16.gmra.mxu0 %v162
    %v658 = vpop.f32.mrf.mxu0
    %v659 = vadd.f32 %v645, %v658
    %v660 = vpop.f32.mrf.mxu0
    %v661 = vadd.f32 %v647, %v660
    %662 = vdwg.mxu0
    %663 = vmatpush.bf16.msra.mxu0 %v478
    %664 = vmatpush.bf16.msra.mxu0 %v475
    %665 = vmatpush.bf16.msra.mxu0 %v472
    %666 = vmatpush.bf16.msra.mxu0 %v469
    %667 = vmatpush.bf16.msra.mxu0 %v466
    %668 = vmatpush.bf16.msra.mxu0 %v463
    %669 = vmatpush.bf16.msra.mxu0 %v460
    %670 = vmatpush.bf16.msra.mxu0 %v457
    %671 = vmatmul.bf16.gmra.mxu0 %v163
    %v672 = vpop.f32.mrf.mxu0
    %v673 = vadd.f32 %v659, %v672
    %v674 = vpop.f32.mrf.mxu0
    %v675 = vadd.f32 %v661, %v674
    %676 = vdwg.mxu0
    %v677 = vpack.c.bf16 %v591, %v589
    %v678 = vpack.c.bf16 %v633, %v631
    %v679 = vpack.c.bf16 %v675, %v673
    %v680 = vld [vmem:[%s3] sm:$0xff]
    %v681 = vld [vmem:[%s3 + $0x8] sm:$0xff]
    %v682 = vld [vmem:[%s3 + $0x10] sm:$0xff]
    %v683 = vld [vmem:[%s3 + $0x18] sm:$0xff]
    %v684 = vld [vmem:[%s3 + $0x20] sm:$0xff]
    %v685 = vld [vmem:[%s3 + $0x28] sm:$0xff]
    %v686 = vld [vmem:[%s3 + $0x30] sm:$0xff]
    %v687 = vld [vmem:[%s3 + $0x38] sm:$0xff]
    %v688 = vld [vmem:[%s3 + $0x40] sm:$0xff]
    %v689 = vld [vmem:[%s3 + $0x48] sm:$0xff]
    %v690 = vld [vmem:[%s3 + $0x50] sm:$0xff]
    %v691 = vld [vmem:[%s3 + $0x58] sm:$0xff]
    %v692 = vld [vmem:[%s3 + $0x60] sm:$0xff]
    %v693 = vld [vmem:[%s3 + $0x68] sm:$0xff]
    %v694 = vld [vmem:[%s3 + $0x70] sm:$0xff]
    %v695 = vld [vmem:[%s3 + $0x78] sm:$0xff]
    %v696 = vld [vmem:[%s3 + $0x80] sm:$0xff]
    %v697 = vld [vmem:[%s3 + $0x88] sm:$0xff]
    %v698 = vld [vmem:[%s3 + $0x90] sm:$0xff]
    %v699 = vld [vmem:[%s3 + $0x98] sm:$0xff]
    %v700 = vld [vmem:[%s3 + $0xa0] sm:$0xff]
    %v701 = vld [vmem:[%s3 + $0xa8] sm:$0xff]
    %v702 = vld [vmem:[%s3 + $0xb0] sm:$0xff]
    %v703 = vld [vmem:[%s3 + $0xb8] sm:$0xff]
    %v704 = vld [vmem:[%s3 + $0xc0] sm:$0xff]
    %v705 = vld [vmem:[%s3 + $0xc8] sm:$0xff]
    %v706 = vld [vmem:[%s3 + $0xd0] sm:$0xff]
    %v707 = vld [vmem:[%s3 + $0xd8] sm:$0xff]
    %v708 = vld [vmem:[%s3 + $0xe0] sm:$0xff]
    %v709 = vld [vmem:[%s3 + $0xe8] sm:$0xff]
    %v710 = vld [vmem:[%s3 + $0xf0] sm:$0xff]
    %v711 = vld [vmem:[%s3 + $0xf8] sm:$0xff]
    %v712 = vld [vmem:[%s3 + $0x100] sm:$0xff]
    %v713 = vld [vmem:[%s3 + $0x108] sm:$0xff]
    %v714 = vld [vmem:[%s3 + $0x110] sm:$0xff]
    %v715 = vld [vmem:[%s3 + $0x118] sm:$0xff]
    %v716 = vld [vmem:[%s3 + $0x120] sm:$0xff]
    %v717 = vld [vmem:[%s3 + $0x128] sm:$0xff]
    %v718 = vld [vmem:[%s3 + $0x130] sm:$0xff]
    %v719 = vld [vmem:[%s3 + $0x138] sm:$0xff]
    %v720 = vld [vmem:[%s3 + $0x140] sm:$0xff]
    %v721 = vld [vmem:[%s3 + $0x148] sm:$0xff]
    %v722 = vld [vmem:[%s3 + $0x150] sm:$0xff]
    %v723 = vld [vmem:[%s3 + $0x158] sm:$0xff]
    %v724 = vld [vmem:[%s3 + $0x160] sm:$0xff]
    %v725 = vld [vmem:[%s3 + $0x168] sm:$0xff]
    %v726 = vld [vmem:[%s3 + $0x170] sm:$0xff]
    %v727 = vld [vmem:[%s3 + $0x178] sm:$0xff]
    %v728 = vld [vmem:[%s4] sm:$0x3]
    %v730 = vperm.slane %v728, 0
    %v731 = vperm.slane %v728, 1
    %v782 = vunpack.c.l.b16 %v680
    %v783 = vunpack.c.h.b16 %v680
    %v784 = vunpack.c.l.b16 %v681
    %v785 = vunpack.c.h.b16 %v681
    %v786 = vunpack.c.l.b16 %v682
    %v787 = vunpack.c.h.b16 %v682
    %v788 = vunpack.c.l.b16 %v683
    %v789 = vunpack.c.h.b16 %v683
    %v790 = vunpack.c.l.b16 %v684
    %v791 = vunpack.c.h.b16 %v684
    %v792 = vunpack.c.l.b16 %v685
    %v793 = vunpack.c.h.b16 %v685
    %v794 = vunpack.c.l.b16 %v686
    %v795 = vunpack.c.h.b16 %v686
    %v796 = vunpack.c.l.b16 %v687
    %v797 = vunpack.c.h.b16 %v687
    %v798 = vunpack.c.l.b16 %v688
    %v799 = vunpack.c.h.b16 %v688
    %v800 = vunpack.c.l.b16 %v689
    %v801 = vunpack.c.h.b16 %v689
    %v802 = vunpack.c.l.b16 %v690
    %v803 = vunpack.c.h.b16 %v690
    %v804 = vunpack.c.l.b16 %v691
    %v805 = vunpack.c.h.b16 %v691
    %v806 = vunpack.c.l.b16 %v692
    %v807 = vunpack.c.h.b16 %v692
    %v808 = vunpack.c.l.b16 %v693
    %v809 = vunpack.c.h.b16 %v693
    %v810 = vunpack.c.l.b16 %v694
    %v811 = vunpack.c.h.b16 %v694
    %v812 = vunpack.c.l.b16 %v695
    %v813 = vunpack.c.h.b16 %v695
    %v814 = vunpack.c.l.b16 %v696
    %v815 = vunpack.c.h.b16 %v696
    %v816 = vunpack.c.l.b16 %v697
    %v817 = vunpack.c.h.b16 %v697
    %v818 = vunpack.c.l.b16 %v698
    %v819 = vunpack.c.h.b16 %v698
    %v820 = vunpack.c.l.b16 %v699
    %v821 = vunpack.c.h.b16 %v699
    %v822 = vunpack.c.l.b16 %v700
    %v823 = vunpack.c.h.b16 %v700
    %v824 = vunpack.c.l.b16 %v701
    %v825 = vunpack.c.h.b16 %v701
    %v826 = vunpack.c.l.b16 %v702
    %v827 = vunpack.c.h.b16 %v702
    %v828 = vunpack.c.l.b16 %v703
    %v829 = vunpack.c.h.b16 %v703
    %v830 = vunpack.c.l.b16 %v704
    %v831 = vunpack.c.h.b16 %v704
    %v832 = vunpack.c.l.b16 %v705
    %v833 = vunpack.c.h.b16 %v705
    %v834 = vunpack.c.l.b16 %v706
    %v835 = vunpack.c.h.b16 %v706
    %v836 = vunpack.c.l.b16 %v707
    %v837 = vunpack.c.h.b16 %v707
    %v838 = vunpack.c.l.b16 %v708
    %v839 = vunpack.c.h.b16 %v708
    %v840 = vunpack.c.l.b16 %v709
    %v841 = vunpack.c.h.b16 %v709
    %v842 = vunpack.c.l.b16 %v710
    %v843 = vunpack.c.h.b16 %v710
    %v844 = vunpack.c.l.b16 %v711
    %v845 = vunpack.c.h.b16 %v711
    %v846 = vunpack.c.l.b16 %v712
    %v847 = vunpack.c.h.b16 %v712
    %v848 = vunpack.c.l.b16 %v713
    %v849 = vunpack.c.h.b16 %v713
    %v850 = vunpack.c.l.b16 %v714
    %v851 = vunpack.c.h.b16 %v714
    %v852 = vunpack.c.l.b16 %v715
    %v853 = vunpack.c.h.b16 %v715
    %v854 = vunpack.c.l.b16 %v716
    %v855 = vunpack.c.h.b16 %v716
    %v856 = vunpack.c.l.b16 %v717
    %v857 = vunpack.c.h.b16 %v717
    %v858 = vunpack.c.l.b16 %v718
    %v859 = vunpack.c.h.b16 %v718
    %v860 = vunpack.c.l.b16 %v719
    %v861 = vunpack.c.h.b16 %v719
    %v862 = vunpack.c.l.b16 %v720
    %v863 = vunpack.c.h.b16 %v720
    %v864 = vunpack.c.l.b16 %v721
    %v865 = vunpack.c.h.b16 %v721
    %v866 = vunpack.c.l.b16 %v722
    %v867 = vunpack.c.h.b16 %v722
    %v868 = vunpack.c.l.b16 %v723
    %v869 = vunpack.c.h.b16 %v723
    %v870 = vunpack.c.l.b16 %v724
    %v871 = vunpack.c.h.b16 %v724
    %v872 = vunpack.c.l.b16 %v725
    %v873 = vunpack.c.h.b16 %v725
    %v874 = vunpack.c.l.b16 %v726
    %v875 = vunpack.c.h.b16 %v726
    %v876 = vunpack.c.l.b16 %v727
    %v877 = vunpack.c.h.b16 %v727
    %v878 = vpack.c.b16 %v784, %v782
    %v879 = vpack.c.b16 %v785, %v783
    %v880 = vpack.c.b16 %v788, %v786
    %v881 = vpack.c.b16 %v789, %v787
    %v882 = vpack.c.b16 %v792, %v790
    %v883 = vpack.c.b16 %v793, %v791
    %v884 = vpack.c.b16 %v796, %v794
    %v885 = vpack.c.b16 %v797, %v795
    %v886 = vpack.c.b16 %v800, %v798
    %v887 = vpack.c.b16 %v801, %v799
    %v888 = vpack.c.b16 %v804, %v802
    %v889 = vpack.c.b16 %v805, %v803
    %v890 = vpack.c.b16 %v808, %v806
    %v891 = vpack.c.b16 %v809, %v807
    %v892 = vpack.c.b16 %v812, %v810
    %v893 = vpack.c.b16 %v813, %v811
    %v894 = vpack.c.b16 %v816, %v814
    %v895 = vpack.c.b16 %v817, %v815
    %v896 = vpack.c.b16 %v820, %v818
    %v897 = vpack.c.b16 %v821, %v819
    %v898 = vpack.c.b16 %v824, %v822
    %v899 = vpack.c.b16 %v825, %v823
    %v900 = vpack.c.b16 %v828, %v826
    %v901 = vpack.c.b16 %v829, %v827
    %v902 = vpack.c.b16 %v832, %v830
    %v903 = vpack.c.b16 %v833, %v831
    %v904 = vpack.c.b16 %v836, %v834
    %v905 = vpack.c.b16 %v837, %v835
    %v906 = vpack.c.b16 %v840, %v838
    %v907 = vpack.c.b16 %v841, %v839
    %v908 = vpack.c.b16 %v844, %v842
    %v909 = vpack.c.b16 %v845, %v843
    %v910 = vpack.c.b16 %v848, %v846
    %v911 = vpack.c.b16 %v849, %v847
    %v912 = vpack.c.b16 %v852, %v850
    %v913 = vpack.c.b16 %v853, %v851
    %v914 = vpack.c.b16 %v856, %v854
    %v915 = vpack.c.b16 %v857, %v855
    %v916 = vpack.c.b16 %v860, %v858
    %v917 = vpack.c.b16 %v861, %v859
    %v918 = vpack.c.b16 %v864, %v862
    %v919 = vpack.c.b16 %v865, %v863
    %v920 = vpack.c.b16 %v868, %v866
    %v921 = vpack.c.b16 %v869, %v867
    %v922 = vpack.c.b16 %v872, %v870
    %v923 = vpack.c.b16 %v873, %v871
    %v924 = vpack.c.b16 %v876, %v874
    %v925 = vpack.c.b16 %v877, %v875
    %974 = vmatpush.bf16.msra.mxu0 %v892
    %975 = vmatpush.bf16.msra.mxu0 %v890
    %976 = vmatpush.bf16.msra.mxu0 %v888
    %977 = vmatpush.bf16.msra.mxu0 %v886
    %978 = vmatpush.bf16.msra.mxu0 %v884
    %979 = vmatpush.bf16.msra.mxu0 %v882
    %980 = vmatpush.bf16.msra.mxu0 %v880
    %981 = vmatpush.bf16.msra.mxu0 %v878
    %982 = vmatmul.bf16.gmra.mxu0 %v677
    %v983 = vpop.f32.mrf.mxu0
    %v984 = vadd.f32 %v730, %v983
    %v985 = vpop.f32.mrf.mxu0
    %v986 = vadd.f32 %v730, %v985
    %987 = vdwg.mxu0
    %988 = vmatpush.bf16.msra.mxu0 %v908
    %989 = vmatpush.bf16.msra.mxu0 %v906
    %990 = vmatpush.bf16.msra.mxu0 %v904
    %991 = vmatpush.bf16.msra.mxu0 %v902
    %992 = vmatpush.bf16.msra.mxu0 %v900
    %993 = vmatpush.bf16.msra.mxu0 %v898
    %994 = vmatpush.bf16.msra.mxu0 %v896
    %995 = vmatpush.bf16.msra.mxu0 %v894
    %996 = vmatmul.bf16.gmra.mxu0 %v678
    %v997 = vpop.f32.mrf.mxu0
    %v998 = vadd.f32 %v984, %v997
    %v999 = vpop.f32.mrf.mxu0
    %v1000 = vadd.f32 %v986, %v999
    %1001 = vdwg.mxu0
    %1002 = vmatpush.bf16.msra.mxu0 %v924
    %1003 = vmatpush.bf16.msra.mxu0 %v922
    %1004 = vmatpush.bf16.msra.mxu0 %v920
    %1005 = vmatpush.bf16.msra.mxu0 %v918
    %1006 = vmatpush.bf16.msra.mxu0 %v916
    %1007 = vmatpush.bf16.msra.mxu0 %v914
    %1008 = vmatpush.bf16.msra.mxu0 %v912
    %1009 = vmatpush.bf16.msra.mxu0 %v910
    %1010 = vmatmul.bf16.gmra.mxu0 %v679
    %v1011 = vpop.f32.mrf.mxu0
    %v1012 = vadd.f32 %v998, %v1011
    %v1013 = vpop.f32.mrf.mxu0
    %v1014 = vadd.f32 %v1000, %v1013
    %1015 = vdwg.mxu0
    %1016 = vmatpush.bf16.msra.mxu0 %v893
    %1017 = vmatpush.bf16.msra.mxu0 %v891
    %1018 = vmatpush.bf16.msra.mxu0 %v889
    %1019 = vmatpush.bf16.msra.mxu0 %v887
    %1020 = vmatpush.bf16.msra.mxu0 %v885
    %1021 = vmatpush.bf16.msra.mxu0 %v883
    %1022 = vmatpush.bf16.msra.mxu0 %v881
    %1023 = vmatpush.bf16.msra.mxu0 %v879
    %1024 = vmatmul.bf16.gmra.mxu0 %v677
    %v1025 = vpop.f32.mrf.mxu0
    %v1026 = vadd.f32 %v731, %v1025
    %v1027 = vpop.f32.mrf.mxu0
    %v1028 = vadd.f32 %v731, %v1027
    %1029 = vdwg.mxu0
    %1030 = vmatpush.bf16.msra.mxu0 %v909
    %1031 = vmatpush.bf16.msra.mxu0 %v907
    %1032 = vmatpush.bf16.msra.mxu0 %v905
    %1033 = vmatpush.bf16.msra.mxu0 %v903
    %1034 = vmatpush.bf16.msra.mxu0 %v901
    %1035 = vmatpush.bf16.msra.mxu0 %v899
    %1036 = vmatpush.bf16.msra.mxu0 %v897
    %1037 = vmatpush.bf16.msra.mxu0 %v895
    %1038 = vmatmul.bf16.gmra.mxu0 %v678
    %v1039 = vpop.f32.mrf.mxu0
    %v1040 = vadd.f32 %v1026, %v1039
    %v1041 = vpop.f32.mrf.mxu0
    %v1042 = vadd.f32 %v1028, %v1041
    %1043 = vdwg.mxu0
    %1044 = vmatpush.bf16.msra.mxu0 %v925
    %1045 = vmatpush.bf16.msra.mxu0 %v923
    %1046 = vmatpush.bf16.msra.mxu0 %v921
    %1047 = vmatpush.bf16.msra.mxu0 %v919
    %1048 = vmatpush.bf16.msra.mxu0 %v917
    %1049 = vmatpush.bf16.msra.mxu0 %v915
    %1050 = vmatpush.bf16.msra.mxu0 %v913
    %1051 = vmatpush.bf16.msra.mxu0 %v911
    %1052 = vmatmul.bf16.gmra.mxu0 %v679
    %v1053 = vpop.f32.mrf.mxu0
    %v1054 = vadd.f32 %v1040, %v1053
    %v1055 = vpop.f32.mrf.mxu0
    %v1056 = vadd.f32 %v1042, %v1055
    %1057 = vdwg.mxu0
    %v1058 = vld [vmem:[%s5] sm:$0xff]
    %v1059 = vld [vmem:[%s5 + $0x8] sm:$0xff]
    %v1060 = vld [vmem:[%s5 + $0x10] sm:$0xff]
    %v1061 = vld [vmem:[%s5 + $0x18] sm:$0xff]
    %v1062 = vld [vmem:[%s6] sm:$0xff]
    %v1063 = vld [vmem:[%s6 + $0x8] sm:$0xff]
    %v1064 = vld [vmem:[%s6 + $0x10] sm:$0xff]
    %v1065 = vld [vmem:[%s6 + $0x18] sm:$0xff]
    %v1066 = vld [vmem:[%s7] sm:$0x1]
    %v1067 = vld [vmem:[%s8] sm:$0x1]
    %v1068 = vld [vmem:[%s9] sm:$0x3]
    %v1069 = vld [vmem:[%s10] sm:$0x3]
    %vm1070 = vcmask 261120
    %v1072 = vsel %vm1070, %v1068, 0
    %1074 = vmatpush.msra.mxu0 0.0
    %1075 = vmatpush.msra.mxu0 0.0
    %1076 = vmatpush.msra.mxu0 0.0
    %1077 = vmatpush.msra.mxu0 0.0
    %1078 = vmatpush.msra.mxu0 0.0
    %1079 = vmatpush.msra.mxu0 0.0
    %1080 = vmatpush.msra.mxu0 0.0
    %1081 = vmatpush.msra.mxu0 0.0
    %1082 = vmatpush.msra.mxu0 0.0
    %1083 = vmatpush.msra.mxu0 0.0
    %1084 = vmatpush.msra.mxu0 0.0
    %1085 = vmatpush.msra.mxu0 0.0
    %1086 = vmatpush.msra.mxu0 %v1061
    %1087 = vmatpush.msra.mxu0 %v1060
    %1088 = vmatpush.msra.mxu0 %v1059
    %1089 = vmatpush.msra.mxu0 %v1058
    %1090 = vmatmul.f32.gmra.mxu0 %v1072
    %v1091 = vpop.f32.mrf.mxu0
    %v1092 = vadd.f32 0.0, %v1091
    %1093 = vdwg.mxu0
    %v1094 = vadd.f32 %v1012, %v1092
    %v1095 = vxor.u32 %v1094, 2147483648
    %v1096 = vmul.f32 %v1095, 1.442695
    %v1097 = vpow.pop %v1096
    %v1098 = vadd.f32 %v1097, 1.0
    %v1099 = vrcp.pop %v1098
    %v1100 = vmul.f32 %v1098, %v1099
    %v1101 = vsub.f32 1.0, %v1100
    %v1102 = vmul.f32 %v1099, %v1101
    %v1103 = vadd.f32 %v1099, %v1102
    %vm1104 = vweird.f32 %v1098
    %vm1105 = vweird.f32 %v1099
    %vm1106 = vmor %vm1104, %vm1105
    %v1107 = vsel %vm1106, %v1099, %v1103
    %v1108 = vand.u32 2147483647, %v1098
    %vm1109 = vcmp.eq.f32.partialorder %v1108, 8.507059e+37
    %v1110 = vand.u32 %v1098, 2147483648
    %v1111 = vor.u32 1.1754944e-38, %v1110
    %v1112 = vsel %vm1109, %v1111, %v1107
    %v1113 = vmul.f32 1.0, %v1112
    %v1115 = vperm.slane %v1066, 0
    %1116 = vrot.lane.b32.xlu0 %v1115, 64
    %v1117 = vpop.permute.xlu0 %1116
    %v1119 = vadd.f32 %v1092, %v1117
    %1121 = vrot.lane.b32.xlu0 %v1119, 64
    %v1122 = vpop.permute.xlu0 %1121
    %v1124 = vmul.f32 %v1113, %v1122
    %1126 = vrot.lane.b32.xlu0 %v1124, 64
    %v1127 = vpop.permute.xlu0 %1126
    %v1129 = vadd.f32 %v1012, %v1127
    %v1130 = vtanh.pop %v1129
    %v1131 = vsub.f32 1.0, %v1113
    %1133 = vrot.lane.b32.xlu0 %v1130, 96
    %v1134 = vpop.permute.xlu0 %1133
    %v1136 = vmul.f32 %v1131, %v1134
    %1137 = vrot.lane.b32.xlu0 %v1068, 32
    %v1138 = vpop.permute.xlu0 %1137
    %v1140 = vmul.f32 %v1113, %v1138
    %v1141 = vadd.f32 %v1136, %v1140
    %v1143 = vsel %vm1070, %v1069, 0
    %1145 = vmatpush.msra.mxu0 0.0
    %1146 = vmatpush.msra.mxu0 0.0
    %1147 = vmatpush.msra.mxu0 0.0
    %1148 = vmatpush.msra.mxu0 0.0
    %1149 = vmatpush.msra.mxu0 0.0
    %1150 = vmatpush.msra.mxu0 0.0
    %1151 = vmatpush.msra.mxu0 0.0
    %1152 = vmatpush.msra.mxu0 0.0
    %1153 = vmatpush.msra.mxu0 0.0
    %1154 = vmatpush.msra.mxu0 0.0
    %1155 = vmatpush.msra.mxu0 0.0
    %1156 = vmatpush.msra.mxu0 0.0
    %1157 = vmatpush.msra.mxu0 %v1065
    %1158 = vmatpush.msra.mxu0 %v1064
    %1159 = vmatpush.msra.mxu0 %v1063
    %1160 = vmatpush.msra.mxu0 %v1062
    %1161 = vmatmul.f32.gmra.mxu0 %v1143
    %v1162 = vpop.f32.mrf.mxu0
    %v1163 = vadd.f32 0.0, %v1162
    %1164 = vdwg.mxu0
    %v1166 = vrot.slane %v1163, 2
    %1167 = vrot.lane.b32.xlu0 %v1166, 96
    %v1168 = vpop.permute.xlu0 %1167
    %v1170 = vadd.f32 %v1014, %v1168
    %v1171 = vxor.u32 %v1170, 2147483648
    %v1172 = vmul.f32 %v1171, 1.442695
    %v1173 = vpow.pop %v1172
    %v1174 = vadd.f32 %v1173, 1.0
    %v1175 = vrcp.pop %v1174
    %v1176 = vmul.f32 %v1174, %v1175
    %v1177 = vsub.f32 1.0, %v1176
    %v1178 = vmul.f32 %v1175, %v1177
    %v1179 = vadd.f32 %v1175, %v1178
    %vm1180 = vweird.f32 %v1174
    %vm1181 = vweird.f32 %v1175
    %vm1182 = vmor %vm1180, %vm1181
    %v1183 = vsel %vm1182, %v1175, %v1179
    %v1184 = vand.u32 2147483647, %v1174
    %vm1185 = vcmp.eq.f32.partialorder %v1184, 8.507059e+37
    %v1186 = vand.u32 %v1174, 2147483648
    %v1187 = vor.u32 1.1754944e-38, %v1186
    %v1188 = vsel %vm1185, %v1187, %v1183
    %v1189 = vmul.f32 1.0, %v1188
    %v1190 = vadd.f32 %v1056, %v1168
    %v1191 = vxor.u32 %v1190, 2147483648
    %v1192 = vmul.f32 %v1191, 1.442695
    %v1193 = vpow.pop %v1192
    %v1194 = vadd.f32 %v1193, 1.0
    %v1195 = vrcp.pop %v1194
    %v1196 = vmul.f32 %v1194, %v1195
    %v1197 = vsub.f32 1.0, %v1196
    %v1198 = vmul.f32 %v1195, %v1197
    %v1199 = vadd.f32 %v1195, %v1198
    %vm1200 = vweird.f32 %v1194
    %vm1201 = vweird.f32 %v1195
    %vm1202 = vmor %vm1200, %vm1201
    %v1203 = vsel %vm1202, %v1195, %v1199
    %v1204 = vand.u32 2147483647, %v1194
    %vm1205 = vcmp.eq.f32.partialorder %v1204, 8.507059e+37
    %v1206 = vand.u32 %v1194, 2147483648
    %v1207 = vor.u32 1.1754944e-38, %v1206
    %v1208 = vsel %vm1205, %v1207, %v1203
    %v1209 = vmul.f32 1.0, %v1208
    %v1211 = vperm.slane %v1067, 0
    %1212 = vrot.lane.b32.xlu0 %v1211, 64
    %v1213 = vpop.permute.xlu0 %1212
    %v1215 = vadd.f32 %v1163, %v1213
    %v1217 = vrot.slane %v1215, 2
    %1218 = vrot.lane.b32.xlu0 %v1217, 32
    %v1219 = vpop.permute.xlu0 %1218
    %v1221 = vmul.f32 %v1189, %v1219
    %1223 = vrot.lane.b32.xlu0 %v1221, 64
    %v1224 = vpop.permute.xlu0 %1223
    %v1226 = vadd.f32 %v1056, %v1224
    %v1227 = vtanh.pop %v1226
    %v1228 = vsub.f32 1.0, %v1209
    %1230 = vrot.lane.b32.xlu0 %v1227, 96
    %v1231 = vpop.permute.xlu0 %1230
    %v1233 = vmul.f32 %v1228, %v1231
    %v1234 = vrot.slane %v1069, 2
    %v1236 = vmul.f32 %v1209, %v1234
    %v1237 = vadd.f32 %v1233, %v1236
    %1239 = vrot.lane.b32.xlu0 %v1141, 96
    %v1240 = vpop.permute.xlu0 %1239
    %v1241 = vsel %vm1070, %v1240, 0
    %1243 = vmatpush.msra.mxu0 0.0
    %1244 = vmatpush.msra.mxu0 0.0
    %1245 = vmatpush.msra.mxu0 0.0
    %1246 = vmatpush.msra.mxu0 0.0
    %1247 = vmatpush.msra.mxu0 0.0
    %1248 = vmatpush.msra.mxu0 0.0
    %1249 = vmatpush.msra.mxu0 0.0
    %1250 = vmatpush.msra.mxu0 0.0
    %1251 = vmatpush.msra.mxu0 0.0
    %1252 = vmatpush.msra.mxu0 0.0
    %1253 = vmatpush.msra.mxu0 0.0
    %1254 = vmatpush.msra.mxu0 0.0
    %1255 = vmatpush.msra.mxu0 %v1061
    %1256 = vmatpush.msra.mxu0 %v1060
    %1257 = vmatpush.msra.mxu0 %v1059
    %1258 = vmatpush.msra.mxu0 %v1058
    %1259 = vmatmul.f32.gmra.mxu0 %v1241
    %v1260 = vpop.f32.mrf.mxu0
    %v1261 = vadd.f32 0.0, %v1260
    %1262 = vdwg.mxu0
    %v1264 = vrot.slane %v1261, 6
    %v1266 = vadd.f32 %v1012, %v1264
    %v1267 = vxor.u32 %v1266, 2147483648
    %v1268 = vmul.f32 %v1267, 1.442695
    %v1269 = vpow.pop %v1268
    %v1270 = vadd.f32 %v1269, 1.0
    %v1271 = vrcp.pop %v1270
    %v1272 = vmul.f32 %v1270, %v1271
    %v1273 = vsub.f32 1.0, %v1272
    %v1274 = vmul.f32 %v1271, %v1273
    %v1275 = vadd.f32 %v1271, %v1274
    %vm1276 = vweird.f32 %v1270
    %vm1277 = vweird.f32 %v1271
    %vm1278 = vmor %vm1276, %vm1277
    %v1279 = vsel %vm1278, %v1271, %v1275
    %v1280 = vand.u32 2147483647, %v1270
    %vm1281 = vcmp.eq.f32.partialorder %v1280, 8.507059e+37
    %v1282 = vand.u32 %v1270, 2147483648
    %v1283 = vor.u32 1.1754944e-38, %v1282
    %v1284 = vsel %vm1281, %v1283, %v1279
    %v1285 = vmul.f32 1.0, %v1284
    %v1286 = vadd.f32 %v1261, %v1117
    %v1288 = vrot.slane %v1286, 6
    %1289 = vrot.lane.b32.xlu0 %v1288, 64
    %v1290 = vpop.permute.xlu0 %1289
    %v1292 = vmul.f32 %v1285, %v1290
    %1294 = vrot.lane.b32.xlu0 %v1292, 64
    %v1295 = vpop.permute.xlu0 %1294
    %v1297 = vadd.f32 %v1012, %v1295
    %v1298 = vtanh.pop %v1297
    %v1299 = vsub.f32 1.0, %v1285
    %1301 = vrot.lane.b32.xlu0 %v1298, 96
    %v1302 = vpop.permute.xlu0 %1301
    %v1304 = vmul.f32 %v1299, %v1302
    %v1305 = vrot.slane %v1141, 6
    %v1307 = vmul.f32 %v1285, %v1305
    %v1308 = vadd.f32 %v1304, %v1307
    %v1310 = vrot.slane %v1237, 6
    %v1311 = vsel %vm1070, %v1310, 0
    %1313 = vmatpush.msra.mxu0 0.0
    %1314 = vmatpush.msra.mxu0 0.0
    %1315 = vmatpush.msra.mxu0 0.0
    %1316 = vmatpush.msra.mxu0 0.0
    %1317 = vmatpush.msra.mxu0 0.0
    %1318 = vmatpush.msra.mxu0 0.0
    %1319 = vmatpush.msra.mxu0 0.0
    %1320 = vmatpush.msra.mxu0 0.0
    %1321 = vmatpush.msra.mxu0 0.0
    %1322 = vmatpush.msra.mxu0 0.0
    %1323 = vmatpush.msra.mxu0 0.0
    %1324 = vmatpush.msra.mxu0 0.0
    %1325 = vmatpush.msra.mxu0 %v1065
    %1326 = vmatpush.msra.mxu0 %v1064
    %1327 = vmatpush.msra.mxu0 %v1063
    %1328 = vmatpush.msra.mxu0 %v1062
    %1329 = vmatmul.f32.gmra.mxu0 %v1311
    %v1330 = vpop.f32.mrf.mxu0
    %v1331 = vadd.f32 0.0, %v1330
    %1332 = vdwg.mxu0
    %v1334 = vrot.slane %v1331, 4
    %1335 = vrot.lane.b32.xlu0 %v1334, 96
    %v1336 = vpop.permute.xlu0 %1335
    %v1338 = vadd.f32 %v1014, %v1336
    %v1339 = vxor.u32 %v1338, 2147483648
    %v1340 = vmul.f32 %v1339, 1.442695
    %v1341 = vpow.pop %v1340
    %v1342 = vadd.f32 %v1341, 1.0
    %v1343 = vrcp.pop %v1342
    %v1344 = vmul.f32 %v1342, %v1343
    %v1345 = vsub.f32 1.0, %v1344
    %v1346 = vmul.f32 %v1343, %v1345
    %v1347 = vadd.f32 %v1343, %v1346
    %vm1348 = vweird.f32 %v1342
    %vm1349 = vweird.f32 %v1343
    %vm1350 = vmor %vm1348, %vm1349
    %v1351 = vsel %vm1350, %v1343, %v1347
    %v1352 = vand.u32 2147483647, %v1342
    %vm1353 = vcmp.eq.f32.partialorder %v1352, 8.507059e+37
    %v1354 = vand.u32 %v1342, 2147483648
    %v1355 = vor.u32 1.1754944e-38, %v1354
    %v1356 = vsel %vm1353, %v1355, %v1351
    %v1357 = vmul.f32 1.0, %v1356
    %v1358 = vadd.f32 %v1056, %v1336
    %v1359 = vxor.u32 %v1358, 2147483648
    %v1360 = vmul.f32 %v1359, 1.442695
    %v1361 = vpow.pop %v1360
    %v1362 = vadd.f32 %v1361, 1.0
    %v1363 = vrcp.pop %v1362
    %v1364 = vmul.f32 %v1362, %v1363
    %v1365 = vsub.f32 1.0, %v1364
    %v1366 = vmul.f32 %v1363, %v1365
    %v1367 = vadd.f32 %v1363, %v1366
    %vm1368 = vweird.f32 %v1362
    %vm1369 = vweird.f32 %v1363
    %vm1370 = vmor %vm1368, %vm1369
    %v1371 = vsel %vm1370, %v1363, %v1367
    %v1372 = vand.u32 2147483647, %v1362
    %vm1373 = vcmp.eq.f32.partialorder %v1372, 8.507059e+37
    %v1374 = vand.u32 %v1362, 2147483648
    %v1375 = vor.u32 1.1754944e-38, %v1374
    %v1376 = vsel %vm1373, %v1375, %v1371
    %v1377 = vmul.f32 1.0, %v1376
    %v1378 = vadd.f32 %v1331, %v1213
    %v1380 = vrot.slane %v1378, 4
    %1381 = vrot.lane.b32.xlu0 %v1380, 32
    %v1382 = vpop.permute.xlu0 %1381
    %v1384 = vmul.f32 %v1357, %v1382
    %1386 = vrot.lane.b32.xlu0 %v1384, 64
    %v1387 = vpop.permute.xlu0 %1386
    %v1389 = vadd.f32 %v1056, %v1387
    %v1390 = vtanh.pop %v1389
    %v1391 = vsub.f32 1.0, %v1377
    %1393 = vrot.lane.b32.xlu0 %v1390, 96
    %v1394 = vpop.permute.xlu0 %1393
    %v1396 = vmul.f32 %v1391, %v1394
    %v1397 = vrot.slane %v1237, 2
    %v1399 = vmul.f32 %v1377, %v1397
    %v1400 = vadd.f32 %v1396, %v1399
    %v1402 = vrot.slane %v1308, 2
    %1403 = vrot.lane.b32.xlu0 %v1402, 96
    %v1404 = vpop.permute.xlu0 %1403
    %v1405 = vsel %vm1070, %v1404, 0
    %1407 = vmatpush.msra.mxu0 0.0
    %1408 = vmatpush.msra.mxu0 0.0
    %1409 = vmatpush.msra.mxu0 0.0
    %1410 = vmatpush.msra.mxu0 0.0
    %1411 = vmatpush.msra.mxu0 0.0
    %1412 = vmatpush.msra.mxu0 0.0
    %1413 = vmatpush.msra.mxu0 0.0
    %1414 = vmatpush.msra.mxu0 0.0
    %1415 = vmatpush.msra.mxu0 0.0
    %1416 = vmatpush.msra.mxu0 0.0
    %1417 = vmatpush.msra.mxu0 0.0
    %1418 = vmatpush.msra.mxu0 0.0
    %1419 = vmatpush.msra.mxu0 %v1061
    %1420 = vmatpush.msra.mxu0 %v1060
    %1421 = vmatpush.msra.mxu0 %v1059
    %1422 = vmatpush.msra.mxu0 %v1058
    %1423 = vmatmul.f32.gmra.mxu0 %v1405
    %v1424 = vpop.f32.mrf.mxu0
    %v1425 = vadd.f32 0.0, %v1424
    %1426 = vdwg.mxu0
    %v1428 = vrot.slane %v1425, 4
    %v1430 = vadd.f32 %v1012, %v1428
    %v1431 = vxor.u32 %v1430, 2147483648
    %v1432 = vmul.f32 %v1431, 1.442695
    %v1433 = vpow.pop %v1432
    %v1434 = vadd.f32 %v1433, 1.0
    %v1435 = vrcp.pop %v1434
    %v1436 = vmul.f32 %v1434, %v1435
    %v1437 = vsub.f32 1.0, %v1436
    %v1438 = vmul.f32 %v1435, %v1437
    %v1439 = vadd.f32 %v1435, %v1438
    %vm1440 = vweird.f32 %v1434
    %vm1441 = vweird.f32 %v1435
    %vm1442 = vmor %vm1440, %vm1441
    %v1443 = vsel %vm1442, %v1435, %v1439
    %v1444 = vand.u32 2147483647, %v1434
    %vm1445 = vcmp.eq.f32.partialorder %v1444, 8.507059e+37
    %v1446 = vand.u32 %v1434, 2147483648
    %v1447 = vor.u32 1.1754944e-38, %v1446
    %v1448 = vsel %vm1445, %v1447, %v1443
    %v1449 = vmul.f32 1.0, %v1448
    %v1450 = vadd.f32 %v1425, %v1117
    %v1452 = vrot.slane %v1450, 4
    %1453 = vrot.lane.b32.xlu0 %v1452, 64
    %v1454 = vpop.permute.xlu0 %1453
    %v1456 = vmul.f32 %v1449, %v1454
    %1458 = vrot.lane.b32.xlu0 %v1456, 64
    %v1459 = vpop.permute.xlu0 %1458
    %v1461 = vadd.f32 %v1012, %v1459
    %v1462 = vtanh.pop %v1461
    %v1463 = vsub.f32 1.0, %v1449
    %1465 = vrot.lane.b32.xlu0 %v1462, 96
    %v1466 = vpop.permute.xlu0 %1465
    %v1468 = vmul.f32 %v1463, %v1466
    %v1469 = vrot.slane %v1308, 6
    %v1471 = vmul.f32 %v1449, %v1469
    %v1472 = vadd.f32 %v1468, %v1471
    %v1474 = vrot.slane %v1400, 4
    %v1475 = vsel %vm1070, %v1474, 0
    %1477 = vmatpush.msra.mxu0 0.0
    %1478 = vmatpush.msra.mxu0 0.0
    %1479 = vmatpush.msra.mxu0 0.0
    %1480 = vmatpush.msra.mxu0 0.0
    %1481 = vmatpush.msra.mxu0 0.0
    %1482 = vmatpush.msra.mxu0 0.0
    %1483 = vmatpush.msra.mxu0 0.0
    %1484 = vmatpush.msra.mxu0 0.0
    %1485 = vmatpush.msra.mxu0 0.0
    %1486 = vmatpush.msra.mxu0 0.0
    %1487 = vmatpush.msra.mxu0 0.0
    %1488 = vmatpush.msra.mxu0 0.0
    %1489 = vmatpush.msra.mxu0 %v1065
    %1490 = vmatpush.msra.mxu0 %v1064
    %1491 = vmatpush.msra.mxu0 %v1063
    %1492 = vmatpush.msra.mxu0 %v1062
    %1493 = vmatmul.f32.gmra.mxu0 %v1475
    %v1494 = vpop.f32.mrf.mxu0
    %v1495 = vadd.f32 0.0, %v1494
    %1496 = vdwg.mxu0
    %v1498 = vrot.slane %v1495, 6
    %1499 = vrot.lane.b32.xlu0 %v1498, 96
    %v1500 = vpop.permute.xlu0 %1499
    %v1502 = vadd.f32 %v1014, %v1500
    %v1503 = vxor.u32 %v1502, 2147483648
    %v1504 = vmul.f32 %v1503, 1.442695
    %v1505 = vpow.pop %v1504
    %v1506 = vadd.f32 %v1505, 1.0
    %v1507 = vrcp.pop %v1506
    %v1508 = vmul.f32 %v1506, %v1507
    %v1509 = vsub.f32 1.0, %v1508
    %v1510 = vmul.f32 %v1507, %v1509
    %v1511 = vadd.f32 %v1507, %v1510
    %vm1512 = vweird.f32 %v1506
    %vm1513 = vweird.f32 %v1507
    %vm1514 = vmor %vm1512, %vm1513
    %v1515 = vsel %vm1514, %v1507, %v1511
    %v1516 = vand.u32 2147483647, %v1506
    %vm1517 = vcmp.eq.f32.partialorder %v1516, 8.507059e+37
    %v1518 = vand.u32 %v1506, 2147483648
    %v1519 = vor.u32 1.1754944e-38, %v1518
    %v1520 = vsel %vm1517, %v1519, %v1515
    %v1521 = vmul.f32 1.0, %v1520
    %v1522 = vadd.f32 %v1056, %v1500
    %v1523 = vxor.u32 %v1522, 2147483648
    %v1524 = vmul.f32 %v1523, 1.442695
    %v1525 = vpow.pop %v1524
    %v1526 = vadd.f32 %v1525, 1.0
    %v1527 = vrcp.pop %v1526
    %v1528 = vmul.f32 %v1526, %v1527
    %v1529 = vsub.f32 1.0, %v1528
    %v1530 = vmul.f32 %v1527, %v1529
    %v1531 = vadd.f32 %v1527, %v1530
    %vm1532 = vweird.f32 %v1526
    %vm1533 = vweird.f32 %v1527
    %vm1534 = vmor %vm1532, %vm1533
    %v1535 = vsel %vm1534, %v1527, %v1531
    %v1536 = vand.u32 2147483647, %v1526
    %vm1537 = vcmp.eq.f32.partialorder %v1536, 8.507059e+37
    %v1538 = vand.u32 %v1526, 2147483648
    %v1539 = vor.u32 1.1754944e-38, %v1538
    %v1540 = vsel %vm1537, %v1539, %v1535
    %v1541 = vmul.f32 1.0, %v1540
    %v1542 = vadd.f32 %v1495, %v1213
    %v1544 = vrot.slane %v1542, 6
    %1545 = vrot.lane.b32.xlu0 %v1544, 32
    %v1546 = vpop.permute.xlu0 %1545
    %v1548 = vmul.f32 %v1521, %v1546
    %1550 = vrot.lane.b32.xlu0 %v1548, 64
    %v1551 = vpop.permute.xlu0 %1550
    %v1553 = vadd.f32 %v1056, %v1551
    %v1554 = vtanh.pop %v1553
    %v1555 = vsub.f32 1.0, %v1541
    %1557 = vrot.lane.b32.xlu0 %v1554, 96
    %v1558 = vpop.permute.xlu0 %1557
    %v1560 = vmul.f32 %v1555, %v1558
    %v1561 = vrot.slane %v1400, 2
    %v1563 = vmul.f32 %v1541, %v1561
    %v1564 = vadd.f32 %v1560, %v1563
    %v1566 = vrot.slane %v1472, 4
    %1567 = vrot.lane.b32.xlu0 %v1566, 96
    %v1568 = vpop.permute.xlu0 %1567
    %v1569 = vsel %vm1070, %v1568, 0
    %1571 = vmatpush.msra.mxu0 0.0
    %1572 = vmatpush.msra.mxu0 0.0
    %1573 = vmatpush.msra.mxu0 0.0
    %1574 = vmatpush.msra.mxu0 0.0
    %1575 = vmatpush.msra.mxu0 0.0
    %1576 = vmatpush.msra.mxu0 0.0
    %1577 = vmatpush.msra.mxu0 0.0
    %1578 = vmatpush.msra.mxu0 0.0
    %1579 = vmatpush.msra.mxu0 0.0
    %1580 = vmatpush.msra.mxu0 0.0
    %1581 = vmatpush.msra.mxu0 0.0
    %1582 = vmatpush.msra.mxu0 0.0
    %1583 = vmatpush.msra.mxu0 %v1061
    %1584 = vmatpush.msra.mxu0 %v1060
    %1585 = vmatpush.msra.mxu0 %v1059
    %1586 = vmatpush.msra.mxu0 %v1058
    %1587 = vmatmul.f32.gmra.mxu0 %v1569
    %v1588 = vpop.f32.mrf.mxu0
    %v1589 = vadd.f32 0.0, %v1588
    %1590 = vdwg.mxu0
    %v1592 = vrot.slane %v1589, 2
    %v1594 = vadd.f32 %v1012, %v1592
    %v1595 = vxor.u32 %v1594, 2147483648
    %v1596 = vmul.f32 %v1595, 1.442695
    %v1597 = vpow.pop %v1596
    %v1598 = vadd.f32 %v1597, 1.0
    %v1599 = vrcp.pop %v1598
    %v1600 = vmul.f32 %v1598, %v1599
    %v1601 = vsub.f32 1.0, %v1600
    %v1602 = vmul.f32 %v1599, %v1601
    %v1603 = vadd.f32 %v1599, %v1602
    %vm1604 = vweird.f32 %v1598
    %vm1605 = vweird.f32 %v1599
    %vm1606 = vmor %vm1604, %vm1605
    %v1607 = vsel %vm1606, %v1599, %v1603
    %v1608 = vand.u32 2147483647, %v1598
    %vm1609 = vcmp.eq.f32.partialorder %v1608, 8.507059e+37
    %v1610 = vand.u32 %v1598, 2147483648
    %v1611 = vor.u32 1.1754944e-38, %v1610
    %v1612 = vsel %vm1609, %v1611, %v1607
    %v1613 = vmul.f32 1.0, %v1612
    %v1614 = vadd.f32 %v1589, %v1117
    %v1616 = vrot.slane %v1614, 2
    %1617 = vrot.lane.b32.xlu0 %v1616, 64
    %v1618 = vpop.permute.xlu0 %1617
    %v1620 = vmul.f32 %v1613, %v1618
    %1622 = vrot.lane.b32.xlu0 %v1620, 64
    %v1623 = vpop.permute.xlu0 %1622
    %v1625 = vadd.f32 %v1012, %v1623
    %v1626 = vtanh.pop %v1625
    %v1627 = vsub.f32 1.0, %v1613
    %1629 = vrot.lane.b32.xlu0 %v1626, 96
    %v1630 = vpop.permute.xlu0 %1629
    %v1632 = vmul.f32 %v1627, %v1630
    %v1633 = vrot.slane %v1472, 6
    %v1635 = vmul.f32 %v1613, %v1633
    %v1636 = vadd.f32 %v1632, %v1635
    %v1638 = vrot.slane %v1564, 2
    %v1639 = vsel %vm1070, %v1638, 0
    %1641 = vmatpush.msra.mxu0 0.0
    %1642 = vmatpush.msra.mxu0 0.0
    %1643 = vmatpush.msra.mxu0 0.0
    %1644 = vmatpush.msra.mxu0 0.0
    %1645 = vmatpush.msra.mxu0 0.0
    %1646 = vmatpush.msra.mxu0 0.0
    %1647 = vmatpush.msra.mxu0 0.0
    %1648 = vmatpush.msra.mxu0 0.0
    %1649 = vmatpush.msra.mxu0 0.0
    %1650 = vmatpush.msra.mxu0 0.0
    %1651 = vmatpush.msra.mxu0 0.0
    %1652 = vmatpush.msra.mxu0 0.0
    %1653 = vmatpush.msra.mxu0 %v1065
    %1654 = vmatpush.msra.mxu0 %v1064
    %1655 = vmatpush.msra.mxu0 %v1063
    %1656 = vmatpush.msra.mxu0 %v1062
    %1657 = vmatmul.f32.gmra.mxu0 %v1639
    %v1658 = vpop.f32.mrf.mxu0
    %v1659 = vadd.f32 0.0, %v1658
    %1660 = vdwg.mxu0
    %1662 = vrot.lane.b32.xlu0 %v1659, 96
    %v1663 = vpop.permute.xlu0 %1662
    %v1665 = vadd.f32 %v1014, %v1663
    %v1666 = vxor.u32 %v1665, 2147483648
    %v1667 = vmul.f32 %v1666, 1.442695
    %v1668 = vpow.pop %v1667
    %v1669 = vadd.f32 %v1668, 1.0
    %v1670 = vrcp.pop %v1669
    %v1671 = vmul.f32 %v1669, %v1670
    %v1672 = vsub.f32 1.0, %v1671
    %v1673 = vmul.f32 %v1670, %v1672
    %v1674 = vadd.f32 %v1670, %v1673
    %vm1675 = vweird.f32 %v1669
    %vm1676 = vweird.f32 %v1670
    %vm1677 = vmor %vm1675, %vm1676
    %v1678 = vsel %vm1677, %v1670, %v1674
    %v1679 = vand.u32 2147483647, %v1669
    %vm1680 = vcmp.eq.f32.partialorder %v1679, 8.507059e+37
    %v1681 = vand.u32 %v1669, 2147483648
    %v1682 = vor.u32 1.1754944e-38, %v1681
    %v1683 = vsel %vm1680, %v1682, %v1678
    %v1684 = vmul.f32 1.0, %v1683
    %v1685 = vadd.f32 %v1056, %v1663
    %v1686 = vxor.u32 %v1685, 2147483648
    %v1687 = vmul.f32 %v1686, 1.442695
    %v1688 = vpow.pop %v1687
    %v1689 = vadd.f32 %v1688, 1.0
    %v1690 = vrcp.pop %v1689
    %v1691 = vmul.f32 %v1689, %v1690
    %v1692 = vsub.f32 1.0, %v1691
    %v1693 = vmul.f32 %v1690, %v1692
    %v1694 = vadd.f32 %v1690, %v1693
    %vm1695 = vweird.f32 %v1689
    %vm1696 = vweird.f32 %v1690
    %vm1697 = vmor %vm1695, %vm1696
    %v1698 = vsel %vm1697, %v1690, %v1694
    %v1699 = vand.u32 2147483647, %v1689
    %vm1700 = vcmp.eq.f32.partialorder %v1699, 8.507059e+37
    %v1701 = vand.u32 %v1689, 2147483648
    %v1702 = vor.u32 1.1754944e-38, %v1701
    %v1703 = vsel %vm1700, %v1702, %v1698
    %v1704 = vmul.f32 1.0, %v1703
    %v1705 = vadd.f32 %v1659, %v1213
    %1707 = vrot.lane.b32.xlu0 %v1705, 32
    %v1708 = vpop.permute.xlu0 %1707
    %v1710 = vmul.f32 %v1684, %v1708
    %1712 = vrot.lane.b32.xlu0 %v1710, 64
    %v1713 = vpop.permute.xlu0 %1712
    %v1715 = vadd.f32 %v1056, %v1713
    %v1716 = vtanh.pop %v1715
    %v1717 = vsub.f32 1.0, %v1704
    %1719 = vrot.lane.b32.xlu0 %v1716, 96
    %v1720 = vpop.permute.xlu0 %1719
    %v1722 = vmul.f32 %v1717, %v1720
    %v1724 = vmul.f32 %v1704, %v1638
    %v1725 = vadd.f32 %v1722, %v1724
    %v1727 = vrot.slane %v1636, 6
    %1728 = vrot.lane.b32.xlu0 %v1727, 96
    %v1729 = vpop.permute.xlu0 %1728
    %v1730 = vsel %vm1070, %v1729, 0
    %1732 = vmatpush.msra.mxu0 0.0
    %1733 = vmatpush.msra.mxu0 0.0
    %1734 = vmatpush.msra.mxu0 0.0
    %1735 = vmatpush.msra.mxu0 0.0
    %1736 = vmatpush.msra.mxu0 0.0
    %1737 = vmatpush.msra.mxu0 0.0
    %1738 = vmatpush.msra.mxu0 0.0
    %1739 = vmatpush.msra.mxu0 0.0
    %1740 = vmatpush.msra.mxu0 0.0
    %1741 = vmatpush.msra.mxu0 0.0
    %1742 = vmatpush.msra.mxu0 0.0
    %1743 = vmatpush.msra.mxu0 0.0
    %1744 = vmatpush.msra.mxu0 %v1061
    %1745 = vmatpush.msra.mxu0 %v1060
    %1746 = vmatpush.msra.mxu0 %v1059
    %1747 = vmatpush.msra.mxu0 %v1058
    %1748 = vmatmul.f32.gmra.mxu0 %v1730
    %v1749 = vpop.f32.mrf.mxu0
    %v1750 = vadd.f32 0.0, %v1749
    %1751 = vdwg.mxu0
    %v1752 = vadd.f32 %v1014, %v1750
    %v1753 = vxor.u32 %v1752, 2147483648
    %v1754 = vmul.f32 %v1753, 1.442695
    %v1755 = vpow.pop %v1754
    %v1756 = vadd.f32 %v1755, 1.0
    %v1757 = vrcp.pop %v1756
    %v1758 = vmul.f32 %v1756, %v1757
    %v1759 = vsub.f32 1.0, %v1758
    %v1760 = vmul.f32 %v1757, %v1759
    %v1761 = vadd.f32 %v1757, %v1760
    %vm1762 = vweird.f32 %v1756
    %vm1763 = vweird.f32 %v1757
    %vm1764 = vmor %vm1762, %vm1763
    %v1765 = vsel %vm1764, %v1757, %v1761
    %v1766 = vand.u32 2147483647, %v1756
    %vm1767 = vcmp.eq.f32.partialorder %v1766, 8.507059e+37
    %v1768 = vand.u32 %v1756, 2147483648
    %v1769 = vor.u32 1.1754944e-38, %v1768
    %v1770 = vsel %vm1767, %v1769, %v1765
    %v1771 = vmul.f32 1.0, %v1770
    %v1772 = vadd.f32 %v1750, %v1117
    %1774 = vrot.lane.b32.xlu0 %v1772, 64
    %v1775 = vpop.permute.xlu0 %1774
    %v1777 = vmul.f32 %v1771, %v1775
    %1779 = vrot.lane.b32.xlu0 %v1777, 64
    %v1780 = vpop.permute.xlu0 %1779
    %v1782 = vadd.f32 %v1014, %v1780
    %v1783 = vtanh.pop %v1782
    %v1784 = vsub.f32 1.0, %v1771
    %1786 = vrot.lane.b32.xlu0 %v1783, 96
    %v1787 = vpop.permute.xlu0 %1786
    %v1789 = vmul.f32 %v1784, %v1787
    %v1791 = vmul.f32 %v1771, %v1727
    %v1792 = vadd.f32 %v1789, %v1791
    %v1794 = vsel %vm1070, %v1725, 0
    %1796 = vmatpush.msra.mxu0 0.0
    %1797 = vmatpush.msra.mxu0 0.0
    %1798 = vmatpush.msra.mxu0 0.0
    %1799 = vmatpush.msra.mxu0 0.0
    %1800 = vmatpush.msra.mxu0 0.0
    %1801 = vmatpush.msra.mxu0 0.0
    %1802 = vmatpush.msra.mxu0 0.0
    %1803 = vmatpush.msra.mxu0 0.0
    %1804 = vmatpush.msra.mxu0 0.0
    %1805 = vmatpush.msra.mxu0 0.0
    %1806 = vmatpush.msra.mxu0 0.0
    %1807 = vmatpush.msra.mxu0 0.0
    %1808 = vmatpush.msra.mxu0 %v1065
    %1809 = vmatpush.msra.mxu0 %v1064
    %1810 = vmatpush.msra.mxu0 %v1063
    %1811 = vmatpush.msra.mxu0 %v1062
    %1812 = vmatmul.f32.gmra.mxu0 %v1794
    %v1813 = vpop.f32.mrf.mxu0
    %v1814 = vadd.f32 0.0, %v1813
    %1815 = vdwg.mxu0
    %v1817 = vrot.slane %v1814, 2
    %1818 = vrot.lane.b32.xlu0 %v1817, 96
    %v1819 = vpop.permute.xlu0 %1818
    %v1821 = vadd.f32 %v1012, %v1819
    %v1822 = vxor.u32 %v1821, 2147483648
    %v1823 = vmul.f32 %v1822, 1.442695
    %v1824 = vpow.pop %v1823
    %v1825 = vadd.f32 %v1824, 1.0
    %v1826 = vrcp.pop %v1825
    %v1827 = vmul.f32 %v1825, %v1826
    %v1828 = vsub.f32 1.0, %v1827
    %v1829 = vmul.f32 %v1826, %v1828
    %v1830 = vadd.f32 %v1826, %v1829
    %vm1831 = vweird.f32 %v1825
    %vm1832 = vweird.f32 %v1826
    %vm1833 = vmor %vm1831, %vm1832
    %v1834 = vsel %vm1833, %v1826, %v1830
    %v1835 = vand.u32 2147483647, %v1825
    %vm1836 = vcmp.eq.f32.partialorder %v1835, 8.507059e+37
    %v1837 = vand.u32 %v1825, 2147483648
    %v1838 = vor.u32 1.1754944e-38, %v1837
    %v1839 = vsel %vm1836, %v1838, %v1834
    %v1840 = vmul.f32 1.0, %v1839
    %v1841 = vadd.f32 %v1054, %v1819
    %v1842 = vxor.u32 %v1841, 2147483648
    %v1843 = vmul.f32 %v1842, 1.442695
    %v1844 = vpow.pop %v1843
    %v1845 = vadd.f32 %v1844, 1.0
    %v1846 = vrcp.pop %v1845
    %v1847 = vmul.f32 %v1845, %v1846
    %v1848 = vsub.f32 1.0, %v1847
    %v1849 = vmul.f32 %v1846, %v1848
    %v1850 = vadd.f32 %v1846, %v1849
    %vm1851 = vweird.f32 %v1845
    %vm1852 = vweird.f32 %v1846
    %vm1853 = vmor %vm1851, %vm1852
    %v1854 = vsel %vm1853, %v1846, %v1850
    %v1855 = vand.u32 2147483647, %v1845
    %vm1856 = vcmp.eq.f32.partialorder %v1855, 8.507059e+37
    %v1857 = vand.u32 %v1845, 2147483648
    %v1858 = vor.u32 1.1754944e-38, %v1857
    %v1859 = vsel %vm1856, %v1858, %v1854
    %v1860 = vmul.f32 1.0, %v1859
    %v1861 = vadd.f32 %v1814, %v1213
    %v1863 = vrot.slane %v1861, 2
    %1864 = vrot.lane.b32.xlu0 %v1863, 32
    %v1865 = vpop.permute.xlu0 %1864
    %v1867 = vmul.f32 %v1840, %v1865
    %1869 = vrot.lane.b32.xlu0 %v1867, 64
    %v1870 = vpop.permute.xlu0 %1869
    %v1872 = vadd.f32 %v1054, %v1870
    %v1873 = vtanh.pop %v1872
    %v1874 = vsub.f32 1.0, %v1860
    %1876 = vrot.lane.b32.xlu0 %v1873, 96
    %v1877 = vpop.permute.xlu0 %1876
    %v1879 = vmul.f32 %v1874, %v1877
    %v1880 = vrot.slane %v1725, 2
    %v1882 = vmul.f32 %v1860, %v1880
    %v1883 = vadd.f32 %v1879, %v1882
    %1885 = vrot.lane.b32.xlu0 %v1792, 96
    %v1886 = vpop.permute.xlu0 %1885
    %v1887 = vsel %vm1070, %v1886, 0
    %1889 = vmatpush.msra.mxu0 0.0
    %1890 = vmatpush.msra.mxu0 0.0
    %1891 = vmatpush.msra.mxu0 0.0
    %1892 = vmatpush.msra.mxu0 0.0
    %1893 = vmatpush.msra.mxu0 0.0
    %1894 = vmatpush.msra.mxu0 0.0
    %1895 = vmatpush.msra.mxu0 0.0
    %1896 = vmatpush.msra.mxu0 0.0
    %1897 = vmatpush.msra.mxu0 0.0
    %1898 = vmatpush.msra.mxu0 0.0
    %1899 = vmatpush.msra.mxu0 0.0
    %1900 = vmatpush.msra.mxu0 0.0
    %1901 = vmatpush.msra.mxu0 %v1061
    %1902 = vmatpush.msra.mxu0 %v1060
    %1903 = vmatpush.msra.mxu0 %v1059
    %1904 = vmatpush.msra.mxu0 %v1058
    %1905 = vmatmul.f32.gmra.mxu0 %v1887
    %v1906 = vpop.f32.mrf.mxu0
    %v1907 = vadd.f32 0.0, %v1906
    %1908 = vdwg.mxu0
    %v1910 = vrot.slane %v1907, 6
    %v1912 = vadd.f32 %v1014, %v1910
    %v1913 = vxor.u32 %v1912, 2147483648
    %v1914 = vmul.f32 %v1913, 1.442695
    %v1915 = vpow.pop %v1914
    %v1916 = vadd.f32 %v1915, 1.0
    %v1917 = vrcp.pop %v1916
    %v1918 = vmul.f32 %v1916, %v1917
    %v1919 = vsub.f32 1.0, %v1918
    %v1920 = vmul.f32 %v1917, %v1919
    %v1921 = vadd.f32 %v1917, %v1920
    %vm1922 = vweird.f32 %v1916
    %vm1923 = vweird.f32 %v1917
    %vm1924 = vmor %vm1922, %vm1923
    %v1925 = vsel %vm1924, %v1917, %v1921
    %v1926 = vand.u32 2147483647, %v1916
    %vm1927 = vcmp.eq.f32.partialorder %v1926, 8.507059e+37
    %v1928 = vand.u32 %v1916, 2147483648
    %v1929 = vor.u32 1.1754944e-38, %v1928
    %v1930 = vsel %vm1927, %v1929, %v1925
    %v1931 = vmul.f32 1.0, %v1930
    %v1932 = vadd.f32 %v1907, %v1117
    %v1934 = vrot.slane %v1932, 6
    %1935 = vrot.lane.b32.xlu0 %v1934, 64
    %v1936 = vpop.permute.xlu0 %1935
    %v1938 = vmul.f32 %v1931, %v1936
    %1940 = vrot.lane.b32.xlu0 %v1938, 64
    %v1941 = vpop.permute.xlu0 %1940
    %v1943 = vadd.f32 %v1014, %v1941
    %v1944 = vtanh.pop %v1943
    %v1945 = vsub.f32 1.0, %v1931
    %1947 = vrot.lane.b32.xlu0 %v1944, 96
    %v1948 = vpop.permute.xlu0 %1947
    %v1950 = vmul.f32 %v1945, %v1948
    %v1951 = vrot.slane %v1792, 6
    %v1953 = vmul.f32 %v1931, %v1951
    %v1954 = vadd.f32 %v1950, %v1953
    %v1956 = vrot.slane %v1883, 6
    %v1957 = vsel %vm1070, %v1956, 0
    %1959 = vmatpush.msra.mxu0 0.0
    %1960 = vmatpush.msra.mxu0 0.0
    %1961 = vmatpush.msra.mxu0 0.0
    %1962 = vmatpush.msra.mxu0 0.0
    %1963 = vmatpush.msra.mxu0 0.0
    %1964 = vmatpush.msra.mxu0 0.0
    %1965 = vmatpush.msra.mxu0 0.0
    %1966 = vmatpush.msra.mxu0 0.0
    %1967 = vmatpush.msra.mxu0 0.0
    %1968 = vmatpush.msra.mxu0 0.0
    %1969 = vmatpush.msra.mxu0 0.0
    %1970 = vmatpush.msra.mxu0 0.0
    %1971 = vmatpush.msra.mxu0 %v1065
    %1972 = vmatpush.msra.mxu0 %v1064
    %1973 = vmatpush.msra.mxu0 %v1063
    %1974 = vmatpush.msra.mxu0 %v1062
    %1975 = vmatmul.f32.gmra.mxu0 %v1957
    %v1976 = vpop.f32.mrf.mxu0
    %v1977 = vadd.f32 0.0, %v1976
    %1978 = vdwg.mxu0
    %v1980 = vrot.slane %v1977, 4
    %1981 = vrot.lane.b32.xlu0 %v1980, 96
    %v1982 = vpop.permute.xlu0 %1981
    %v1984 = vadd.f32 %v1012, %v1982
    %v1985 = vxor.u32 %v1984, 2147483648
    %v1986 = vmul.f32 %v1985, 1.442695
    %v1987 = vpow.pop %v1986
    %v1988 = vadd.f32 %v1987, 1.0
    %v1989 = vrcp.pop %v1988
    %v1990 = vmul.f32 %v1988, %v1989
    %v1991 = vsub.f32 1.0, %v1990
    %v1992 = vmul.f32 %v1989, %v1991
    %v1993 = vadd.f32 %v1989, %v1992
    %vm1994 = vweird.f32 %v1988
    %vm1995 = vweird.f32 %v1989
    %vm1996 = vmor %vm1994, %vm1995
    %v1997 = vsel %vm1996, %v1989, %v1993
    %v1998 = vand.u32 2147483647, %v1988
    %vm1999 = vcmp.eq.f32.partialorder %v1998, 8.507059e+37
    %v2000 = vand.u32 %v1988, 2147483648
    %v2001 = vor.u32 1.1754944e-38, %v2000
    %v2002 = vsel %vm1999, %v2001, %v1997
    %v2003 = vmul.f32 1.0, %v2002
    %v2004 = vadd.f32 %v1054, %v1982
    %v2005 = vxor.u32 %v2004, 2147483648
    %v2006 = vmul.f32 %v2005, 1.442695
    %v2007 = vpow.pop %v2006
    %v2008 = vadd.f32 %v2007, 1.0
    %v2009 = vrcp.pop %v2008
    %v2010 = vmul.f32 %v2008, %v2009
    %v2011 = vsub.f32 1.0, %v2010
    %v2012 = vmul.f32 %v2009, %v2011
    %v2013 = vadd.f32 %v2009, %v2012
    %vm2014 = vweird.f32 %v2008
    %vm2015 = vweird.f32 %v2009
    %vm2016 = vmor %vm2014, %vm2015
    %v2017 = vsel %vm2016, %v2009, %v2013
    %v2018 = vand.u32 2147483647, %v2008
    %vm2019 = vcmp.eq.f32.partialorder %v2018, 8.507059e+37
    %v2020 = vand.u32 %v2008, 2147483648
    %v2021 = vor.u32 1.1754944e-38, %v2020
    %v2022 = vsel %vm2019, %v2021, %v2017
    %v2023 = vmul.f32 1.0, %v2022
    %v2024 = vadd.f32 %v1977, %v1213
    %v2026 = vrot.slane %v2024, 4
    %2027 = vrot.lane.b32.xlu0 %v2026, 32
    %v2028 = vpop.permute.xlu0 %2027
    %v2030 = vmul.f32 %v2003, %v2028
    %2032 = vrot.lane.b32.xlu0 %v2030, 64
    %v2033 = vpop.permute.xlu0 %2032
    %v2035 = vadd.f32 %v1054, %v2033
    %v2036 = vtanh.pop %v2035
    %v2037 = vsub.f32 1.0, %v2023
    %2039 = vrot.lane.b32.xlu0 %v2036, 96
    %v2040 = vpop.permute.xlu0 %2039
    %v2042 = vmul.f32 %v2037, %v2040
    %v2043 = vrot.slane %v1883, 2
    %v2045 = vmul.f32 %v2023, %v2043
    %v2046 = vadd.f32 %v2042, %v2045
    %v2048 = vrot.slane %v1954, 2
    %2049 = vrot.lane.b32.xlu0 %v2048, 96
    %v2050 = vpop.permute.xlu0 %2049
    %v2051 = vsel %vm1070, %v2050, 0
    %2053 = vmatpush.msra.mxu0 0.0
    %2054 = vmatpush.msra.mxu0 0.0
    %2055 = vmatpush.msra.mxu0 0.0
    %2056 = vmatpush.msra.mxu0 0.0
    %2057 = vmatpush.msra.mxu0 0.0
    %2058 = vmatpush.msra.mxu0 0.0
    %2059 = vmatpush.msra.mxu0 0.0
    %2060 = vmatpush.msra.mxu0 0.0
    %2061 = vmatpush.msra.mxu0 0.0
    %2062 = vmatpush.msra.mxu0 0.0
    %2063 = vmatpush.msra.mxu0 0.0
    %2064 = vmatpush.msra.mxu0 0.0
    %2065 = vmatpush.msra.mxu0 %v1061
    %2066 = vmatpush.msra.mxu0 %v1060
    %2067 = vmatpush.msra.mxu0 %v1059
    %2068 = vmatpush.msra.mxu0 %v1058
    %2069 = vmatmul.f32.gmra.mxu0 %v2051
    %v2070 = vpop.f32.mrf.mxu0
    %v2071 = vadd.f32 0.0, %v2070
    %2072 = vdwg.mxu0
    %v2074 = vrot.slane %v2071, 4
    %v2076 = vadd.f32 %v1014, %v2074
    %v2077 = vxor.u32 %v2076, 2147483648
    %v2078 = vmul.f32 %v2077, 1.442695
    %v2079 = vpow.pop %v2078
    %v2080 = vadd.f32 %v2079, 1.0
    %v2081 = vrcp.pop %v2080
    %v2082 = vmul.f32 %v2080, %v2081
    %v2083 = vsub.f32 1.0, %v2082
    %v2084 = vmul.f32 %v2081, %v2083
    %v2085 = vadd.f32 %v2081, %v2084
    %vm2086 = vweird.f32 %v2080
    %vm2087 = vweird.f32 %v2081
    %vm2088 = vmor %vm2086, %vm2087
    %v2089 = vsel %vm2088, %v2081, %v2085
    %v2090 = vand.u32 2147483647, %v2080
    %vm2091 = vcmp.eq.f32.partialorder %v2090, 8.507059e+37
    %v2092 = vand.u32 %v2080, 2147483648
    %v2093 = vor.u32 1.1754944e-38, %v2092
    %v2094 = vsel %vm2091, %v2093, %v2089
    %v2095 = vmul.f32 1.0, %v2094
    %v2096 = vadd.f32 %v2071, %v1117
    %v2098 = vrot.slane %v2096, 4
    %2099 = vrot.lane.b32.xlu0 %v2098, 64
    %v2100 = vpop.permute.xlu0 %2099
    %v2102 = vmul.f32 %v2095, %v2100
    %2104 = vrot.lane.b32.xlu0 %v2102, 64
    %v2105 = vpop.permute.xlu0 %2104
    %v2107 = vadd.f32 %v1014, %v2105
    %v2108 = vtanh.pop %v2107
    %v2109 = vsub.f32 1.0, %v2095
    %2111 = vrot.lane.b32.xlu0 %v2108, 96
    %v2112 = vpop.permute.xlu0 %2111
    %v2114 = vmul.f32 %v2109, %v2112
    %v2115 = vrot.slane %v1954, 6
    %v2117 = vmul.f32 %v2095, %v2115
    %v2118 = vadd.f32 %v2114, %v2117
    %v2120 = vrot.slane %v2046, 4
    %v2121 = vsel %vm1070, %v2120, 0
    %2123 = vmatpush.msra.mxu0 0.0
    %2124 = vmatpush.msra.mxu0 0.0
    %2125 = vmatpush.msra.mxu0 0.0
    %2126 = vmatpush.msra.mxu0 0.0
    %2127 = vmatpush.msra.mxu0 0.0
    %2128 = vmatpush.msra.mxu0 0.0
    %2129 = vmatpush.msra.mxu0 0.0
    %2130 = vmatpush.msra.mxu0 0.0
    %2131 = vmatpush.msra.mxu0 0.0
    %2132 = vmatpush.msra.mxu0 0.0
    %2133 = vmatpush.msra.mxu0 0.0
    %2134 = vmatpush.msra.mxu0 0.0
    %2135 = vmatpush.msra.mxu0 %v1065
    %2136 = vmatpush.msra.mxu0 %v1064
    %2137 = vmatpush.msra.mxu0 %v1063
    %2138 = vmatpush.msra.mxu0 %v1062
    %2139 = vmatmul.f32.gmra.mxu0 %v2121
    %v2140 = vpop.f32.mrf.mxu0
    %v2141 = vadd.f32 0.0, %v2140
    %2142 = vdwg.mxu0
    %v2144 = vrot.slane %v2141, 6
    %2145 = vrot.lane.b32.xlu0 %v2144, 96
    %v2146 = vpop.permute.xlu0 %2145
    %v2148 = vadd.f32 %v1012, %v2146
    %v2149 = vxor.u32 %v2148, 2147483648
    %v2150 = vmul.f32 %v2149, 1.442695
    %v2151 = vpow.pop %v2150
    %v2152 = vadd.f32 %v2151, 1.0
    %v2153 = vrcp.pop %v2152
    %v2154 = vmul.f32 %v2152, %v2153
    %v2155 = vsub.f32 1.0, %v2154
    %v2156 = vmul.f32 %v2153, %v2155
    %v2157 = vadd.f32 %v2153, %v2156
    %vm2158 = vweird.f32 %v2152
    %vm2159 = vweird.f32 %v2153
    %vm2160 = vmor %vm2158, %vm2159
    %v2161 = vsel %vm2160, %v2153, %v2157
    %v2162 = vand.u32 2147483647, %v2152
    %vm2163 = vcmp.eq.f32.partialorder %v2162, 8.507059e+37
    %v2164 = vand.u32 %v2152, 2147483648
    %v2165 = vor.u32 1.1754944e-38, %v2164
    %v2166 = vsel %vm2163, %v2165, %v2161
    %v2167 = vmul.f32 1.0, %v2166
    %v2168 = vadd.f32 %v1054, %v2146
    %v2169 = vxor.u32 %v2168, 2147483648
    %v2170 = vmul.f32 %v2169, 1.442695
    %v2171 = vpow.pop %v2170
    %v2172 = vadd.f32 %v2171, 1.0
    %v2173 = vrcp.pop %v2172
    %v2174 = vmul.f32 %v2172, %v2173
    %v2175 = vsub.f32 1.0, %v2174
    %v2176 = vmul.f32 %v2173, %v2175
    %v2177 = vadd.f32 %v2173, %v2176
    %vm2178 = vweird.f32 %v2172
    %vm2179 = vweird.f32 %v2173
    %vm2180 = vmor %vm2178, %vm2179
    %v2181 = vsel %vm2180, %v2173, %v2177
    %v2182 = vand.u32 2147483647, %v2172
    %vm2183 = vcmp.eq.f32.partialorder %v2182, 8.507059e+37
    %v2184 = vand.u32 %v2172, 2147483648
    %v2185 = vor.u32 1.1754944e-38, %v2184
    %v2186 = vsel %vm2183, %v2185, %v2181
    %v2187 = vmul.f32 1.0, %v2186
    %v2188 = vadd.f32 %v2141, %v1213
    %v2190 = vrot.slane %v2188, 6
    %2191 = vrot.lane.b32.xlu0 %v2190, 32
    %v2192 = vpop.permute.xlu0 %2191
    %v2194 = vmul.f32 %v2167, %v2192
    %2196 = vrot.lane.b32.xlu0 %v2194, 64
    %v2197 = vpop.permute.xlu0 %2196
    %v2199 = vadd.f32 %v1054, %v2197
    %v2200 = vtanh.pop %v2199
    %v2201 = vsub.f32 1.0, %v2187
    %2203 = vrot.lane.b32.xlu0 %v2200, 96
    %v2204 = vpop.permute.xlu0 %2203
    %v2206 = vmul.f32 %v2201, %v2204
    %v2207 = vrot.slane %v2046, 2
    %v2209 = vmul.f32 %v2187, %v2207
    %v2210 = vadd.f32 %v2206, %v2209
    %v2212 = vrot.slane %v2118, 4
    %2213 = vrot.lane.b32.xlu0 %v2212, 96
    %v2214 = vpop.permute.xlu0 %2213
    %v2215 = vsel %vm1070, %v2214, 0
    %2217 = vmatpush.msra.mxu0 0.0
    %2218 = vmatpush.msra.mxu0 0.0
    %2219 = vmatpush.msra.mxu0 0.0
    %2220 = vmatpush.msra.mxu0 0.0
    %2221 = vmatpush.msra.mxu0 0.0
    %2222 = vmatpush.msra.mxu0 0.0
    %2223 = vmatpush.msra.mxu0 0.0
    %2224 = vmatpush.msra.mxu0 0.0
    %2225 = vmatpush.msra.mxu0 0.0
    %2226 = vmatpush.msra.mxu0 0.0
    %2227 = vmatpush.msra.mxu0 0.0
    %2228 = vmatpush.msra.mxu0 0.0
    %2229 = vmatpush.msra.mxu0 %v1061
    %2230 = vmatpush.msra.mxu0 %v1060
    %2231 = vmatpush.msra.mxu0 %v1059
    %2232 = vmatpush.msra.mxu0 %v1058
    %2233 = vmatmul.f32.gmra.mxu0 %v2215
    %v2234 = vpop.f32.mrf.mxu0
    %v2235 = vadd.f32 0.0, %v2234
    %2236 = vdwg.mxu0
    %v2238 = vrot.slane %v2235, 2
    %v2240 = vadd.f32 %v1014, %v2238
    %v2241 = vxor.u32 %v2240, 2147483648
    %v2242 = vmul.f32 %v2241, 1.442695
    %v2243 = vpow.pop %v2242
    %v2244 = vadd.f32 %v2243, 1.0
    %v2245 = vrcp.pop %v2244
    %v2246 = vmul.f32 %v2244, %v2245
    %v2247 = vsub.f32 1.0, %v2246
    %v2248 = vmul.f32 %v2245, %v2247
    %v2249 = vadd.f32 %v2245, %v2248
    %vm2250 = vweird.f32 %v2244
    %vm2251 = vweird.f32 %v2245
    %vm2252 = vmor %vm2250, %vm2251
    %v2253 = vsel %vm2252, %v2245, %v2249
    %v2254 = vand.u32 2147483647, %v2244
    %vm2255 = vcmp.eq.f32.partialorder %v2254, 8.507059e+37
    %v2256 = vand.u32 %v2244, 2147483648
    %v2257 = vor.u32 1.1754944e-38, %v2256
    %v2258 = vsel %vm2255, %v2257, %v2253
    %v2259 = vmul.f32 1.0, %v2258
    %v2260 = vadd.f32 %v2235, %v1117
    %v2262 = vrot.slane %v2260, 2
    %2263 = vrot.lane.b32.xlu0 %v2262, 64
    %v2264 = vpop.permute.xlu0 %2263
    %v2266 = vmul.f32 %v2259, %v2264
    %2268 = vrot.lane.b32.xlu0 %v2266, 64
    %v2269 = vpop.permute.xlu0 %2268
    %v2271 = vadd.f32 %v1014, %v2269
    %v2272 = vtanh.pop %v2271
    %v2273 = vsub.f32 1.0, %v2259
    %2275 = vrot.lane.b32.xlu0 %v2272, 96
    %v2276 = vpop.permute.xlu0 %2275
    %v2278 = vmul.f32 %v2273, %v2276
    %v2279 = vrot.slane %v2118, 6
    %v2281 = vmul.f32 %v2259, %v2279
    %v2282 = vadd.f32 %v2278, %v2281
    %v2284 = vrot.slane %v2210, 2
    %v2285 = vsel %vm1070, %v2284, 0
    %2287 = vmatpush.msra.mxu0 0.0
    %2288 = vmatpush.msra.mxu0 0.0
    %2289 = vmatpush.msra.mxu0 0.0
    %2290 = vmatpush.msra.mxu0 0.0
    %2291 = vmatpush.msra.mxu0 0.0
    %2292 = vmatpush.msra.mxu0 0.0
    %2293 = vmatpush.msra.mxu0 0.0
    %2294 = vmatpush.msra.mxu0 0.0
    %2295 = vmatpush.msra.mxu0 0.0
    %2296 = vmatpush.msra.mxu0 0.0
    %2297 = vmatpush.msra.mxu0 0.0
    %2298 = vmatpush.msra.mxu0 0.0
    %2299 = vmatpush.msra.mxu0 %v1065
    %2300 = vmatpush.msra.mxu0 %v1064
    %2301 = vmatpush.msra.mxu0 %v1063
    %2302 = vmatpush.msra.mxu0 %v1062
    %2303 = vmatmul.f32.gmra.mxu0 %v2285
    %v2304 = vpop.f32.mrf.mxu0
    %v2305 = vadd.f32 0.0, %v2304
    %2306 = vdwg.mxu0
    %2308 = vrot.lane.b32.xlu0 %v2305, 96
    %v2309 = vpop.permute.xlu0 %2308
    %v2311 = vadd.f32 %v1012, %v2309
    %v2312 = vxor.u32 %v2311, 2147483648
    %v2313 = vmul.f32 %v2312, 1.442695
    %v2314 = vpow.pop %v2313
    %v2315 = vadd.f32 %v2314, 1.0
    %v2316 = vrcp.pop %v2315
    %v2317 = vmul.f32 %v2315, %v2316
    %v2318 = vsub.f32 1.0, %v2317
    %v2319 = vmul.f32 %v2316, %v2318
    %v2320 = vadd.f32 %v2316, %v2319
    %vm2321 = vweird.f32 %v2315
    %vm2322 = vweird.f32 %v2316
    %vm2323 = vmor %vm2321, %vm2322
    %v2324 = vsel %vm2323, %v2316, %v2320
    %v2325 = vand.u32 2147483647, %v2315
    %vm2326 = vcmp.eq.f32.partialorder %v2325, 8.507059e+37
    %v2327 = vand.u32 %v2315, 2147483648
    %v2328 = vor.u32 1.1754944e-38, %v2327
    %v2329 = vsel %vm2326, %v2328, %v2324
    %v2330 = vmul.f32 1.0, %v2329
    %v2331 = vadd.f32 %v1054, %v2309
    %v2332 = vxor.u32 %v2331, 2147483648
    %v2333 = vmul.f32 %v2332, 1.442695
    %v2334 = vpow.pop %v2333
    %v2335 = vadd.f32 %v2334, 1.0
    %v2336 = vrcp.pop %v2335
    %v2337 = vmul.f32 %v2335, %v2336
    %v2338 = vsub.f32 1.0, %v2337
    %v2339 = vmul.f32 %v2336, %v2338
    %v2340 = vadd.f32 %v2336, %v2339
    %vm2341 = vweird.f32 %v2335
    %vm2342 = vweird.f32 %v2336
    %vm2343 = vmor %vm2341, %vm2342
    %v2344 = vsel %vm2343, %v2336, %v2340
    %v2345 = vand.u32 2147483647, %v2335
    %vm2346 = vcmp.eq.f32.partialorder %v2345, 8.507059e+37
    %v2347 = vand.u32 %v2335, 2147483648
    %v2348 = vor.u32 1.1754944e-38, %v2347
    %v2349 = vsel %vm2346, %v2348, %v2344
    %v2350 = vmul.f32 1.0, %v2349
    %v2351 = vadd.f32 %v2305, %v1213
    %2353 = vrot.lane.b32.xlu0 %v2351, 32
    %v2354 = vpop.permute.xlu0 %2353
    %v2356 = vmul.f32 %v2330, %v2354
    %2358 = vrot.lane.b32.xlu0 %v2356, 64
    %v2359 = vpop.permute.xlu0 %2358
    %v2361 = vadd.f32 %v1054, %v2359
    %v2362 = vtanh.pop %v2361
    %v2363 = vsub.f32 1.0, %v2350
    %2365 = vrot.lane.b32.xlu0 %v2362, 96
    %v2366 = vpop.permute.xlu0 %2365
    %v2368 = vmul.f32 %v2363, %v2366
    %v2370 = vmul.f32 %v2350, %v2284
    %v2371 = vadd.f32 %v2368, %v2370
    %2374 = vrot.lane.b32.xlu0 %v2371, 32
    %v2375 = vpop.permute.xlu0 %2374
    %v2377 = vsel %vm1070, %v1240, %v2375
    %2378 = vrot.lane.b32.xlu0 %v1308, 96
    %v2379 = vpop.permute.xlu0 %2378
    %2381 = vrot.lane.b32.xlu0 %v2210, 32
    %v2382 = vpop.permute.xlu0 %2381
    %v2384 = vsel %vm1070, %v2379, %v2382
    %2385 = vrot.lane.b32.xlu0 %v1472, 96
    %v2386 = vpop.permute.xlu0 %2385
    %2388 = vrot.lane.b32.xlu0 %v2046, 32
    %v2389 = vpop.permute.xlu0 %2388
    %v2391 = vsel %vm1070, %v2386, %v2389
    %2392 = vrot.lane.b32.xlu0 %v1636, 96
    %v2393 = vpop.permute.xlu0 %2392
    %2395 = vrot.lane.b32.xlu0 %v1883, 32
    %v2396 = vpop.permute.xlu0 %2395
    %v2398 = vsel %vm1070, %v2393, %v2396
    %2400 = vrot.lane.b32.xlu0 %v1725, 32
    %v2401 = vpop.permute.xlu0 %2400
    %v2403 = vsel %vm1070, %v1886, %v2401
    %2404 = vrot.lane.b32.xlu0 %v1954, 96
    %v2405 = vpop.permute.xlu0 %2404
    %2407 = vrot.lane.b32.xlu0 %v1564, 32
    %v2408 = vpop.permute.xlu0 %2407
    %v2410 = vsel %vm1070, %v2405, %v2408
    %2411 = vrot.lane.b32.xlu0 %v2118, 96
    %v2412 = vpop.permute.xlu0 %2411
    %2414 = vrot.lane.b32.xlu0 %v1400, 32
    %v2415 = vpop.permute.xlu0 %2414
    %v2417 = vsel %vm1070, %v2412, %v2415
    %2419 = vrot.lane.b32.xlu0 %v2282, 96
    %v2420 = vpop.permute.xlu0 %2419
    %2422 = vrot.lane.b32.xlu0 %v1237, 32
    %v2423 = vpop.permute.xlu0 %2422
    %v2425 = vsel %vm1070, %v2420, %v2423
    %vm2426 = vcmask 1041408
    %v2427 = vsel %vm2426, %v2377, %v2384
    %vm2428 = vcmask 1043456
    %v2429 = vsel %vm2428, %v2427, %v2391
    %vm2430 = vcmask 1045504
    %v2431 = vsel %vm2430, %v2429, %v2398
    %v2432 = vsel %vm2426, %v2403, %v2410
    %v2433 = vsel %vm2428, %v2432, %v2417
    %v2434 = vsel %vm2430, %v2433, %v2425
    %vm2435 = vcmask 523264
    %2436 = vst.msk [vmem:[#allocation2] sm:$0xff] %vm2435, %v2431
    %2437 = vst.msk [vmem:[#allocation2 + $0x8] sm:$0xff] %vm2435, %v2434
    %v2438 = vrot.slane %v2282, 6
    %v2440 = vrot.slane %v2371, 6
    %2441 = vrot.lane.b32.xlu0 %v2440, 32
    %v2442 = vpop.permute.xlu0 %2441
    %v2444 = vsel %vm2426, %v2438, %v2442
    %2446 = vrot.lane.b32.xlu0 %v2444, 96
    %v2447 = vpop.permute.xlu0 %2446
    %vm2449 = vcmask 257024
    %2450 = vst.msk [vmem:[#allocation4] sm:$0xf] %vm2449, %v2447
    %v2451 = vrot.slane %v2371, 2
    %2452 = vrot.lane.b32.xlu0 %v2451, 32
    %v2453 = vpop.permute.xlu0 %2452
    %v2455 = vsel %vm1070, %v2420, %v2453
    %vm2456 = vcmask 523270
    %2457 = vst.msk [vmem:[#allocation6 - $0x6] sm:$0xc0] %vm2456, %v2455
    // Predicated region
    $region46: #{word_att_net.1} parent=1 // pred_check
      _
    $region47: #{word_att_net.1} parent=1 // pred_check_branch
      %2459 = sbr.rel (0) target = $region49
    $region48: #{word_att_net.1} parent=1 // pred_region
      %2461 = vsyncadd [#allocation3], 0
      %s2462 = sshll.u32 [#allocation2], 4
      %s2463 = int_to_ptr.vmem [resolvable:$true] %s2462
      %s2464 = sshll.u32 %s11, 4
      %s2465 = int_to_ptr.hbm [resolvable:$true] %s2464
      %2470 = dma.vmem_to_hbm [thread:$0]  %s2463, 256, %s2465, [#allocation3], 128, 128, 8
    $region49: #{word_att_net.1} parent=1 // pred_fallthru
      _
    // Predicated region
    $region50: #{word_att_net.1} parent=1 // pred_check
      _
    $region51: #{word_att_net.1} parent=1 // pred_check_branch
      %2472 = sbr.rel (0) target = $region53
    $region52: #{word_att_net.1} parent=1 // pred_region
      %2474 = vsyncadd [#allocation5], 0
      %s2476 = sshll.u32 [#allocation4], 4
      %s2477 = int_to_ptr.vmem [resolvable:$true] %s2476
      %s2478 = sshll.u32 %s12, 4
      %s2479 = int_to_ptr.hbm [resolvable:$true] %s2478
      %2481 = dma.vmem_to_hbm [thread:$0]  %s2477, 64, %s2479, [#allocation5]
    $region53: #{word_att_net.1} parent=1 // pred_fallthru
      _
    // Predicated region
    $region54: #{word_att_net.1} parent=1 // pred_check
      _
    $region55: #{word_att_net.1} parent=1 // pred_check_branch
      %2483 = sbr.rel (0) target = $region57
    $region56: #{word_att_net.1} parent=1 // pred_region
      %2485 = vsyncadd [#allocation5], 0
      %s2487 = sshll.u32 [#allocation6], 4
      %s2488 = int_to_ptr.vmem [resolvable:$true] %s2487
      %s2489 = sshll.u32 %s13, 4
      %s2490 = int_to_ptr.hbm [resolvable:$true] %s2489
      %2492 = dma.vmem_to_hbm [thread:$0]  %s2488, 32, %s2490, [#allocation5]
    $region57: #{word_att_net.1} parent=1 // pred_fallthru
      _
    // Predicated region
    $region58: #{word_att_net.1} parent=1 // pred_check
      _
    $region59: #{word_att_net.1} parent=1 // pred_check_branch
      %2494 = sbr.rel (0) target = $region61
    $region60: #{word_att_net.1} parent=1 // pred_region
      %2496 = dma.done [#allocation3], 256
    $region61: #{word_att_net.1} parent=1 // pred_fallthru
      _
    // Predicated region
    $region62: #{word_att_net.1} parent=1 // pred_check
      _
    $region63: #{word_att_net.1} parent=1 // pred_check_branch
      %2498 = sbr.rel (0) target = $region65
    $region64: #{word_att_net.1} parent=1 // pred_region
      %2500 = dma.done [#allocation5], 64
    $region65: #{word_att_net.1} parent=1 // pred_fallthru
      _
    // Predicated region
    $region66: #{word_att_net.1} parent=1 // pred_check
      _
    $region67: #{word_att_net.1} parent=1 // pred_check_branch
      %2502 = sbr.rel (0) target = $region69
    $region68: #{word_att_net.1} parent=1 // pred_region
      %2504 = dma.done [#allocation5], 32
    $region69: #{word_att_net.1} parent=1 // pred_fallthru
      _
    %2505 = vsyncpa [#allocation3], 1
    %2506 = vsyncpa [#allocation5], 1

</llo_original>
